<compile_context>
chip_gen: v5e
topology: v5e:2x2
jax: 0.10.0
libtpu: 0.0.40
codegen_flags: <defaults>
</compile_context>

<pallas_src>
import jax
import jax.numpy as jnp
import numpy as np
from jax import lax
from jax.experimental import pallas as pl
from jax.experimental.pallas import tpu as pltpu

CIN, COUT, KH, KW = 3, 3, 3, 3
EPS = 1e-5


def _make_fused_kernel(H, W):
    L = H * W
    KHW = KH * KW
    w_is_pow2 = (W & (W - 1)) == 0

    def kernel(x_ref, w_ref, b_ref, g_ref, beta_ref, o_ref):
        # x_ref    : (BB, CIN, L)          f32 VMEM   (flattened NCHW batch chunk)
        # w_ref    : (COUT*CIN*KH*KW,)     f32 SMEM   (flattened OIHW conv weights)
        # b_ref    : (COUT,)               f32 SMEM   (conv bias)
        # g_ref    : (COUT,)               f32 SMEM   (LayerNorm gamma)
        # beta_ref : (COUT,)               f32 SMEM   (LayerNorm beta)
        # o_ref    : (BB, COUT, L)         f32 VMEM   (lane-dense conv+LN+ReLU out)
        BB = x_ref.shape[0]

        # --- boundary masks for "padding=1": computed once, combined per tap -----
        idx = lax.broadcasted_iota(jnp.int32, (BB, L), 1)
        if w_is_pow2:
            row = lax.shift_right_logical(idx, W.bit_length() - 1)
            col = jnp.bitwise_and(idx, W - 1)
        else:
            row = idx // W
            col = idx % W
        mh = [row >= 1, None, row <= (H - 2)]    # dh = 0, 1, 2
        mw = [col >= 1, None, col <= (W - 2)]    # dw = 0, 1, 2

        tap_masks = []
        tap_shifts = []
        for dh in range(KH):
            for dw in range(KW):
                off = (dh - 1) * W + (dw - 1)
                m = mh[dh]
                if mw[dw] is not None:
                    m = mw[dw] if m is None else jnp.logical_and(m, mw[dw])
                tap_masks.append(m)
                tap_shifts.append((-off) % L)

        # --- conv: ci-outer; build 9 windows, fold into 3 per-co accumulators ----
        acc = [jnp.full((BB, L), b_ref[co], dtype=jnp.float32)
               for co in range(COUT)]
        for ci in range(CIN):
            xc = x_ref[:, ci, :]                              # (BB, L)
            wins = []
            for k in range(KHW):
                s = tap_shifts[k]
                # roll within each image (XLU slot); masks kill padded positions.
                win = xc if s == 0 else pltpu.roll(xc, shift=s, axis=1)
                if tap_masks[k] is not None:
                    win = jnp.where(tap_masks[k], win, 0.0)
                wins.append(win)
            for co in range(COUT):
                base = (co * CIN + ci) * KHW
                part = w_ref[base] * wins[0]
                for k in range(1, KHW):
                    part = part + w_ref[base + k] * wins[k]
                acc[co] = acc[co] + part                      # 3 short chains/co

        # --- LayerNorm over the channel dim (C=3) per (b, l), affine + ReLU ------
        inv_c = 1.0 / COUT
        mean = (acc[0] + acc[1] + acc[2]) * inv_c
        d = [a - mean for a in acc]
        var = (d[0] * d[0] + d[1] * d[1] + d[2] * d[2]) * inv_c
        inv = lax.rsqrt(var + EPS)                            # EUP slot

        for co in range(COUT):
            y = d[co] * (inv * g_ref[co]) + beta_ref[co]
            o_ref[:, co, :] = jnp.maximum(y, 0.0)             # lane-dense (L) store

    return kernel


def _pick_batch_chunk(B, L):
    """Batch-chunk size: prefer >=2 grid steps (v7x megacore) and tiny VMEM blocks."""
    budget = 8 * 1024 * 1024  # conservative per-step working-set bound (bytes)
    best = 1
    for bb in (2, 4, 8):
        if B % bb != 0 or B // bb < 2:
            continue
        # 8-sublane-padded in/out blocks, double buffered, + ~16 live (bb, L) f32.
        est = 2 * 2 * (bb * 8 * L * 4) + 16 * bb * L * 4
        if est <= budget:
            best = bb
    return best


def model_forward(x, conv_w, conv_b, ln_w, ln_b):
    """x: (B, 3, H, W) f32 (NCHW, like PyTorch). Returns (B, H*W, 3) f32."""
    B, C, H, W = x.shape
    assert C == CIN
    L = H * W
    BB = _pick_batch_chunk(B, L)

    x_flat = x.reshape(B, CIN, L).astype(jnp.float32)    # free contiguous reshape
    w_flat = conv_w.reshape(-1).astype(jnp.float32)

    out_bcl = pl.pallas_call(
        _make_fused_kernel(H, W),
        out_shape=jax.ShapeDtypeStruct((B, COUT, L), jnp.float32),
        grid=(B // BB,),                                  # parallel over batch chunks
        in_specs=[
            pl.BlockSpec((BB, CIN, L), lambda i: (i, 0, 0)),
            pl.BlockSpec(memory_space=pltpu.MemorySpace.SMEM),
            pl.BlockSpec(memory_space=pltpu.MemorySpace.SMEM),
            pl.BlockSpec(memory_space=pltpu.MemorySpace.SMEM),
            pl.BlockSpec(memory_space=pltpu.MemorySpace.SMEM),
        ],
        out_specs=pl.BlockSpec((BB, COUT, L), lambda i: (i, 0, 0)),
        compiler_params=pltpu.CompilerParams(
            dimension_semantics=("parallel",),
            # Explicit scoped-VMEM cap: above the 16/32 MiB defaults, with headroom
            # under v7x's 64 MiB physical VMEM.
            vmem_limit_bytes=48 * 1024 * 1024,
        ),
    )(x_flat, w_flat, conv_b.astype(jnp.float32), ln_w.astype(jnp.float32),
      ln_b.astype(jnp.float32))

    # torch: x.view(B, C, L).permute(0, 2, 1) -> (B, L, C)
    # TODO(synk): drop/fuse this transpose if the consumer can take (B, C, L); it is
    # a standalone HBM pass over the output.
    return out_bcl.transpose(0, 2, 1)


def _reference(x, conv_w, conv_b, ln_w, ln_b):
    y = jax.lax.conv_general_dilated(
        x, conv_w, window_strides=(1, 1), padding=((1, 1), (1, 1)),
        dimension_numbers=("NCHW", "OIHW", "NCHW"))
    y = y + conv_b[None, :, None, None]
    B, C, H, W = y.shape
    y = y.reshape(B, C, H * W).transpose(0, 2, 1)
    mean = y.mean(-1, keepdims=True)
    var = ((y - mean) ** 2).mean(-1, keepdims=True)
    y = (y - mean) / jnp.sqrt(var + EPS) * ln_w + ln_b
    return jnp.maximum(y, 0.0)


if __name__ == "__main__":
    key = jax.random.PRNGKey(0)
    k_x, k_w, k_b, k_g, k_beta = jax.random.split(key, 5)

    B, H, W = 2, 16, 16
    x = jax.random.normal(k_x, (B, CIN, H, W), dtype=jnp.float32)

    # Shapes match nn.Conv2d(3, 3, 3, padding=1) and nn.LayerNorm(3)
    conv_w = 0.2 * jax.random.normal(k_w, (COUT, CIN, KH, KW), dtype=jnp.float32)
    conv_b = 0.1 * jax.random.normal(k_b, (COUT,), dtype=jnp.float32)
    ln_w = 1.0 + 0.1 * jax.random.normal(k_g, (COUT,), dtype=jnp.float32)
    ln_b = 0.1 * jax.random.normal(k_beta, (COUT,), dtype=jnp.float32)

    out = model_forward(x, conv_w, conv_b, ln_w, ln_b)
    out = jax.block_until_ready(out)

    ref = _reference(x, conv_w, conv_b, ln_w, ln_b)
    np.testing.assert_allclose(np.asarray(out), np.asarray(ref), rtol=1e-5, atol=1e-5)
    assert out.shape == (B, H * W, COUT)

    print("KERNEL_OK")
</pallas_src>

<mosaic_0001>
module attributes {stable_mosaic.version = 11 : i64} {
  func.func @kernel(%arg0: i32, %arg1: memref<1x3x256xf32, #tpu.memory_space<vmem>>, %arg2: memref<81xf32, #tpu.memory_space<smem>>, %arg3: memref<3xf32, #tpu.memory_space<smem>>, %arg4: memref<3xf32, #tpu.memory_space<smem>>, %arg5: memref<3xf32, #tpu.memory_space<smem>>, %arg6: memref<1x3x256xf32, #tpu.memory_space<vmem>>) attributes {dimension_semantics = [#tpu.dimension_semantics<parallel>], iteration_bounds = array<i64: 2>, scalar_prefetch = 0 : i64, scratch_operands = 0 : i64, tpu.core_type = #tpu.core_type<tc>, window_params = [{transform_indices = @transform_0, window_bounds = array<i64: 1, 3, 256>}, {transform_indices = @transform_1, window_bounds = array<i64: 81>}, {transform_indices = @transform_2, window_bounds = array<i64: 3>}, {transform_indices = @transform_3, window_bounds = array<i64: 3>}, {transform_indices = @transform_4, window_bounds = array<i64: 3>}, {transform_indices = @transform_5, window_bounds = array<i64: 1, 3, 256>}]} {
    %0 = tpu.iota {dimensions = array<i32: 1>} : vector<1x256xi32>
    %c4_i32 = arith.constant 4 : i32
    %1 = vector.broadcast %c4_i32 : i32 to vector<1x256xi32>
    %2 = arith.shrui %0, %1 : vector<1x256xi32>
    %c15_i32 = arith.constant 15 : i32
    %3 = vector.broadcast %c15_i32 : i32 to vector<1x256xi32>
    %4 = arith.andi %0, %3 : vector<1x256xi32>
    %c1_i32 = arith.constant 1 : i32
    %5 = vector.broadcast %c1_i32 : i32 to vector<1x256xi32>
    %6 = arith.cmpi sge, %2, %5 : vector<1x256xi32>
    %c14_i32 = arith.constant 14 : i32
    %7 = vector.broadcast %c14_i32 : i32 to vector<1x256xi32>
    %8 = arith.cmpi sle, %2, %7 : vector<1x256xi32>
    %c1_i32_0 = arith.constant 1 : i32
    %9 = vector.broadcast %c1_i32_0 : i32 to vector<1x256xi32>
    %10 = arith.cmpi sge, %4, %9 : vector<1x256xi32>
    %c14_i32_1 = arith.constant 14 : i32
    %11 = vector.broadcast %c14_i32_1 : i32 to vector<1x256xi32>
    %12 = arith.cmpi sle, %4, %11 : vector<1x256xi32>
    %13 = arith.andi %6, %10 : vector<1x256xi1>
    %14 = arith.andi %6, %12 : vector<1x256xi1>
    %15 = arith.andi %8, %10 : vector<1x256xi1>
    %16 = arith.andi %8, %12 : vector<1x256xi1>
    %c0 = arith.constant 0 : index
    %17 = memref.load %arg3[%c0] : memref<3xf32, #tpu.memory_space<smem>>
    %18 = vector.broadcast %17 : f32 to vector<1x256xf32>
    %c1 = arith.constant 1 : index
    %19 = memref.load %arg3[%c1] : memref<3xf32, #tpu.memory_space<smem>>
    %20 = vector.broadcast %19 : f32 to vector<1x256xf32>
    %c2 = arith.constant 2 : index
    %21 = memref.load %arg3[%c2] : memref<3xf32, #tpu.memory_space<smem>>
    %22 = vector.broadcast %21 : f32 to vector<1x256xf32>
    %c0_2 = arith.constant 0 : index
    %c0_3 = arith.constant 0 : index
    %c0_4 = arith.constant 0 : index
    %23 = vector.load %arg1[%c0_2, %c0_3, %c0_4] : memref<1x3x256xf32, #tpu.memory_space<vmem>>, vector<1x1x256xf32>
    %24 = vector.shape_cast %23 : vector<1x1x256xf32> to vector<1x256xf32>
    %c17_i32 = arith.constant 17 : i32
    %25 = tpu.dynamic_rotate %24 by %c17_i32 dim 1 : vector<1x256xf32>, i32 -> vector<1x256xf32>
    %cst = arith.constant 0.000000e+00 : f32
    %26 = vector.broadcast %cst : f32 to vector<1x256xf32>
    %27 = arith.select %13, %25, %26 : vector<1x256xi1>, vector<1x256xf32>
    %c16_i32 = arith.constant 16 : i32
    %28 = tpu.dynamic_rotate %24 by %c16_i32 dim 1 : vector<1x256xf32>, i32 -> vector<1x256xf32>
    %cst_5 = arith.constant 0.000000e+00 : f32
    %29 = vector.broadcast %cst_5 : f32 to vector<1x256xf32>
    %30 = arith.select %6, %28, %29 : vector<1x256xi1>, vector<1x256xf32>
    %c15_i32_6 = arith.constant 15 : i32
    %31 = tpu.dynamic_rotate %24 by %c15_i32_6 dim 1 : vector<1x256xf32>, i32 -> vector<1x256xf32>
    %cst_7 = arith.constant 0.000000e+00 : f32
    %32 = vector.broadcast %cst_7 : f32 to vector<1x256xf32>
    %33 = arith.select %14, %31, %32 : vector<1x256xi1>, vector<1x256xf32>
    %c1_i32_8 = arith.constant 1 : i32
    %34 = tpu.dynamic_rotate %24 by %c1_i32_8 dim 1 : vector<1x256xf32>, i32 -> vector<1x256xf32>
    %cst_9 = arith.constant 0.000000e+00 : f32
    %35 = vector.broadcast %cst_9 : f32 to vector<1x256xf32>
    %36 = arith.select %10, %34, %35 : vector<1x256xi1>, vector<1x256xf32>
    %c255_i32 = arith.constant 255 : i32
    %37 = tpu.dynamic_rotate %24 by %c255_i32 dim 1 : vector<1x256xf32>, i32 -> vector<1x256xf32>
    %cst_10 = arith.constant 0.000000e+00 : f32
    %38 = vector.broadcast %cst_10 : f32 to vector<1x256xf32>
    %39 = arith.select %12, %37, %38 : vector<1x256xi1>, vector<1x256xf32>
    %c241_i32 = arith.constant 241 : i32
    %40 = tpu.dynamic_rotate %24 by %c241_i32 dim 1 : vector<1x256xf32>, i32 -> vector<1x256xf32>
    %cst_11 = arith.constant 0.000000e+00 : f32
    %41 = vector.broadcast %cst_11 : f32 to vector<1x256xf32>
    %42 = arith.select %15, %40, %41 : vector<1x256xi1>, vector<1x256xf32>
    %c240_i32 = arith.constant 240 : i32
    %43 = tpu.dynamic_rotate %24 by %c240_i32 dim 1 : vector<1x256xf32>, i32 -> vector<1x256xf32>
    %cst_12 = arith.constant 0.000000e+00 : f32
    %44 = vector.broadcast %cst_12 : f32 to vector<1x256xf32>
    %45 = arith.select %8, %43, %44 : vector<1x256xi1>, vector<1x256xf32>
    %c239_i32 = arith.constant 239 : i32
    %46 = tpu.dynamic_rotate %24 by %c239_i32 dim 1 : vector<1x256xf32>, i32 -> vector<1x256xf32>
    %cst_13 = arith.constant 0.000000e+00 : f32
    %47 = vector.broadcast %cst_13 : f32 to vector<1x256xf32>
    %48 = arith.select %16, %46, %47 : vector<1x256xi1>, vector<1x256xf32>
    %c0_14 = arith.constant 0 : index
    %49 = memref.load %arg2[%c0_14] : memref<81xf32, #tpu.memory_space<smem>>
    %50 = vector.broadcast %49 : f32 to vector<1x256xf32>
    %51 = arith.mulf %50, %27 : vector<1x256xf32>
    %c1_15 = arith.constant 1 : index
    %52 = memref.load %arg2[%c1_15] : memref<81xf32, #tpu.memory_space<smem>>
    %53 = vector.broadcast %52 : f32 to vector<1x256xf32>
    %54 = arith.mulf %53, %30 : vector<1x256xf32>
    %55 = arith.addf %51, %54 : vector<1x256xf32>
    %c2_16 = arith.constant 2 : index
    %56 = memref.load %arg2[%c2_16] : memref<81xf32, #tpu.memory_space<smem>>
    %57 = vector.broadcast %56 : f32 to vector<1x256xf32>
    %58 = arith.mulf %57, %33 : vector<1x256xf32>
    %59 = arith.addf %55, %58 : vector<1x256xf32>
    %c3 = arith.constant 3 : index
    %60 = memref.load %arg2[%c3] : memref<81xf32, #tpu.memory_space<smem>>
    %61 = vector.broadcast %60 : f32 to vector<1x256xf32>
    %62 = arith.mulf %61, %36 : vector<1x256xf32>
    %63 = arith.addf %59, %62 : vector<1x256xf32>
    %c4 = arith.constant 4 : index
    %64 = memref.load %arg2[%c4] : memref<81xf32, #tpu.memory_space<smem>>
    %65 = vector.broadcast %64 : f32 to vector<1x256xf32>
    %66 = arith.mulf %65, %24 : vector<1x256xf32>
    %67 = arith.addf %63, %66 : vector<1x256xf32>
    %c5 = arith.constant 5 : index
    %68 = memref.load %arg2[%c5] : memref<81xf32, #tpu.memory_space<smem>>
    %69 = vector.broadcast %68 : f32 to vector<1x256xf32>
    %70 = arith.mulf %69, %39 : vector<1x256xf32>
    %71 = arith.addf %67, %70 : vector<1x256xf32>
    %c6 = arith.constant 6 : index
    %72 = memref.load %arg2[%c6] : memref<81xf32, #tpu.memory_space<smem>>
    %73 = vector.broadcast %72 : f32 to vector<1x256xf32>
    %74 = arith.mulf %73, %42 : vector<1x256xf32>
    %75 = arith.addf %71, %74 : vector<1x256xf32>
    %c7 = arith.constant 7 : index
    %76 = memref.load %arg2[%c7] : memref<81xf32, #tpu.memory_space<smem>>
    %77 = vector.broadcast %76 : f32 to vector<1x256xf32>
    %78 = arith.mulf %77, %45 : vector<1x256xf32>
    %79 = arith.addf %75, %78 : vector<1x256xf32>
    %c8 = arith.constant 8 : index
    %80 = memref.load %arg2[%c8] : memref<81xf32, #tpu.memory_space<smem>>
    %81 = vector.broadcast %80 : f32 to vector<1x256xf32>
    %82 = arith.mulf %81, %48 : vector<1x256xf32>
    %83 = arith.addf %79, %82 : vector<1x256xf32>
    %84 = arith.addf %18, %83 : vector<1x256xf32>
    %c27 = arith.constant 27 : index
    %85 = memref.load %arg2[%c27] : memref<81xf32, #tpu.memory_space<smem>>
    %86 = vector.broadcast %85 : f32 to vector<1x256xf32>
    %87 = arith.mulf %86, %27 : vector<1x256xf32>
    %c28 = arith.constant 28 : index
    %88 = memref.load %arg2[%c28] : memref<81xf32, #tpu.memory_space<smem>>
    %89 = vector.broadcast %88 : f32 to vector<1x256xf32>
    %90 = arith.mulf %89, %30 : vector<1x256xf32>
    %91 = arith.addf %87, %90 : vector<1x256xf32>
    %c29 = arith.constant 29 : index
    %92 = memref.load %arg2[%c29] : memref<81xf32, #tpu.memory_space<smem>>
    %93 = vector.broadcast %92 : f32 to vector<1x256xf32>
    %94 = arith.mulf %93, %33 : vector<1x256xf32>
    %95 = arith.addf %91, %94 : vector<1x256xf32>
    %c30 = arith.constant 30 : index
    %96 = memref.load %arg2[%c30] : memref<81xf32, #tpu.memory_space<smem>>
    %97 = vector.broadcast %96 : f32 to vector<1x256xf32>
    %98 = arith.mulf %97, %36 : vector<1x256xf32>
    %99 = arith.addf %95, %98 : vector<1x256xf32>
    %c31 = arith.constant 31 : index
    %100 = memref.load %arg2[%c31] : memref<81xf32, #tpu.memory_space<smem>>
    %101 = vector.broadcast %100 : f32 to vector<1x256xf32>
    %102 = arith.mulf %101, %24 : vector<1x256xf32>
    %103 = arith.addf %99, %102 : vector<1x256xf32>
    %c32 = arith.constant 32 : index
    %104 = memref.load %arg2[%c32] : memref<81xf32, #tpu.memory_space<smem>>
    %105 = vector.broadcast %104 : f32 to vector<1x256xf32>
    %106 = arith.mulf %105, %39 : vector<1x256xf32>
    %107 = arith.addf %103, %106 : vector<1x256xf32>
    %c33 = arith.constant 33 : index
    %108 = memref.load %arg2[%c33] : memref<81xf32, #tpu.memory_space<smem>>
    %109 = vector.broadcast %108 : f32 to vector<1x256xf32>
    %110 = arith.mulf %109, %42 : vector<1x256xf32>
    %111 = arith.addf %107, %110 : vector<1x256xf32>
    %c34 = arith.constant 34 : index
    %112 = memref.load %arg2[%c34] : memref<81xf32, #tpu.memory_space<smem>>
    %113 = vector.broadcast %112 : f32 to vector<1x256xf32>
    %114 = arith.mulf %113, %45 : vector<1x256xf32>
    %115 = arith.addf %111, %114 : vector<1x256xf32>
    %c35 = arith.constant 35 : index
    %116 = memref.load %arg2[%c35] : memref<81xf32, #tpu.memory_space<smem>>
    %117 = vector.broadcast %116 : f32 to vector<1x256xf32>
    %118 = arith.mulf %117, %48 : vector<1x256xf32>
    %119 = arith.addf %115, %118 : vector<1x256xf32>
    %120 = arith.addf %20, %119 : vector<1x256xf32>
    %c54 = arith.constant 54 : index
    %121 = memref.load %arg2[%c54] : memref<81xf32, #tpu.memory_space<smem>>
    %122 = vector.broadcast %121 : f32 to vector<1x256xf32>
    %123 = arith.mulf %122, %27 : vector<1x256xf32>
    %c55 = arith.constant 55 : index
    %124 = memref.load %arg2[%c55] : memref<81xf32, #tpu.memory_space<smem>>
    %125 = vector.broadcast %124 : f32 to vector<1x256xf32>
    %126 = arith.mulf %125, %30 : vector<1x256xf32>
    %127 = arith.addf %123, %126 : vector<1x256xf32>
    %c56 = arith.constant 56 : index
    %128 = memref.load %arg2[%c56] : memref<81xf32, #tpu.memory_space<smem>>
    %129 = vector.broadcast %128 : f32 to vector<1x256xf32>
    %130 = arith.mulf %129, %33 : vector<1x256xf32>
    %131 = arith.addf %127, %130 : vector<1x256xf32>
    %c57 = arith.constant 57 : index
    %132 = memref.load %arg2[%c57] : memref<81xf32, #tpu.memory_space<smem>>
    %133 = vector.broadcast %132 : f32 to vector<1x256xf32>
    %134 = arith.mulf %133, %36 : vector<1x256xf32>
    %135 = arith.addf %131, %134 : vector<1x256xf32>
    %c58 = arith.constant 58 : index
    %136 = memref.load %arg2[%c58] : memref<81xf32, #tpu.memory_space<smem>>
    %137 = vector.broadcast %136 : f32 to vector<1x256xf32>
    %138 = arith.mulf %137, %24 : vector<1x256xf32>
    %139 = arith.addf %135, %138 : vector<1x256xf32>
    %c59 = arith.constant 59 : index
    %140 = memref.load %arg2[%c59] : memref<81xf32, #tpu.memory_space<smem>>
    %141 = vector.broadcast %140 : f32 to vector<1x256xf32>
    %142 = arith.mulf %141, %39 : vector<1x256xf32>
    %143 = arith.addf %139, %142 : vector<1x256xf32>
    %c60 = arith.constant 60 : index
    %144 = memref.load %arg2[%c60] : memref<81xf32, #tpu.memory_space<smem>>
    %145 = vector.broadcast %144 : f32 to vector<1x256xf32>
    %146 = arith.mulf %145, %42 : vector<1x256xf32>
    %147 = arith.addf %143, %146 : vector<1x256xf32>
    %c61 = arith.constant 61 : index
    %148 = memref.load %arg2[%c61] : memref<81xf32, #tpu.memory_space<smem>>
    %149 = vector.broadcast %148 : f32 to vector<1x256xf32>
    %150 = arith.mulf %149, %45 : vector<1x256xf32>
    %151 = arith.addf %147, %150 : vector<1x256xf32>
    %c62 = arith.constant 62 : index
    %152 = memref.load %arg2[%c62] : memref<81xf32, #tpu.memory_space<smem>>
    %153 = vector.broadcast %152 : f32 to vector<1x256xf32>
    %154 = arith.mulf %153, %48 : vector<1x256xf32>
    %155 = arith.addf %151, %154 : vector<1x256xf32>
    %156 = arith.addf %22, %155 : vector<1x256xf32>
    %c0_17 = arith.constant 0 : index
    %c1_18 = arith.constant 1 : index
    %c0_19 = arith.constant 0 : index
    %157 = vector.load %arg1[%c0_17, %c1_18, %c0_19] : memref<1x3x256xf32, #tpu.memory_space<vmem>>, vector<1x1x256xf32>
    %158 = vector.shape_cast %157 : vector<1x1x256xf32> to vector<1x256xf32>
    %c17_i32_20 = arith.constant 17 : i32
    %159 = tpu.dynamic_rotate %158 by %c17_i32_20 dim 1 : vector<1x256xf32>, i32 -> vector<1x256xf32>
    %cst_21 = arith.constant 0.000000e+00 : f32
    %160 = vector.broadcast %cst_21 : f32 to vector<1x256xf32>
    %161 = arith.select %13, %159, %160 : vector<1x256xi1>, vector<1x256xf32>
    %c16_i32_22 = arith.constant 16 : i32
    %162 = tpu.dynamic_rotate %158 by %c16_i32_22 dim 1 : vector<1x256xf32>, i32 -> vector<1x256xf32>
    %cst_23 = arith.constant 0.000000e+00 : f32
    %163 = vector.broadcast %cst_23 : f32 to vector<1x256xf32>
    %164 = arith.select %6, %162, %163 : vector<1x256xi1>, vector<1x256xf32>
    %c15_i32_24 = arith.constant 15 : i32
    %165 = tpu.dynamic_rotate %158 by %c15_i32_24 dim 1 : vector<1x256xf32>, i32 -> vector<1x256xf32>
    %cst_25 = arith.constant 0.000000e+00 : f32
    %166 = vector.broadcast %cst_25 : f32 to vector<1x256xf32>
    %167 = arith.select %14, %165, %166 : vector<1x256xi1>, vector<1x256xf32>
    %c1_i32_26 = arith.constant 1 : i32
    %168 = tpu.dynamic_rotate %158 by %c1_i32_26 dim 1 : vector<1x256xf32>, i32 -> vector<1x256xf32>
    %cst_27 = arith.constant 0.000000e+00 : f32
    %169 = vector.broadcast %cst_27 : f32 to vector<1x256xf32>
    %170 = arith.select %10, %168, %169 : vector<1x256xi1>, vector<1x256xf32>
    %c255_i32_28 = arith.constant 255 : i32
    %171 = tpu.dynamic_rotate %158 by %c255_i32_28 dim 1 : vector<1x256xf32>, i32 -> vector<1x256xf32>
    %cst_29 = arith.constant 0.000000e+00 : f32
    %172 = vector.broadcast %cst_29 : f32 to vector<1x256xf32>
    %173 = arith.select %12, %171, %172 : vector<1x256xi1>, vector<1x256xf32>
    %c241_i32_30 = arith.constant 241 : i32
    %174 = tpu.dynamic_rotate %158 by %c241_i32_30 dim 1 : vector<1x256xf32>, i32 -> vector<1x256xf32>
    %cst_31 = arith.constant 0.000000e+00 : f32
    %175 = vector.broadcast %cst_31 : f32 to vector<1x256xf32>
    %176 = arith.select %15, %174, %175 : vector<1x256xi1>, vector<1x256xf32>
    %c240_i32_32 = arith.constant 240 : i32
    %177 = tpu.dynamic_rotate %158 by %c240_i32_32 dim 1 : vector<1x256xf32>, i32 -> vector<1x256xf32>
    %cst_33 = arith.constant 0.000000e+00 : f32
    %178 = vector.broadcast %cst_33 : f32 to vector<1x256xf32>
    %179 = arith.select %8, %177, %178 : vector<1x256xi1>, vector<1x256xf32>
    %c239_i32_34 = arith.constant 239 : i32
    %180 = tpu.dynamic_rotate %158 by %c239_i32_34 dim 1 : vector<1x256xf32>, i32 -> vector<1x256xf32>
    %cst_35 = arith.constant 0.000000e+00 : f32
    %181 = vector.broadcast %cst_35 : f32 to vector<1x256xf32>
    %182 = arith.select %16, %180, %181 : vector<1x256xi1>, vector<1x256xf32>
    %c9 = arith.constant 9 : index
    %183 = memref.load %arg2[%c9] : memref<81xf32, #tpu.memory_space<smem>>
    %184 = vector.broadcast %183 : f32 to vector<1x256xf32>
    %185 = arith.mulf %184, %161 : vector<1x256xf32>
    %c10 = arith.constant 10 : index
    %186 = memref.load %arg2[%c10] : memref<81xf32, #tpu.memory_space<smem>>
    %187 = vector.broadcast %186 : f32 to vector<1x256xf32>
    %188 = arith.mulf %187, %164 : vector<1x256xf32>
    %189 = arith.addf %185, %188 : vector<1x256xf32>
    %c11 = arith.constant 11 : index
    %190 = memref.load %arg2[%c11] : memref<81xf32, #tpu.memory_space<smem>>
    %191 = vector.broadcast %190 : f32 to vector<1x256xf32>
    %192 = arith.mulf %191, %167 : vector<1x256xf32>
    %193 = arith.addf %189, %192 : vector<1x256xf32>
    %c12 = arith.constant 12 : index
    %194 = memref.load %arg2[%c12] : memref<81xf32, #tpu.memory_space<smem>>
    %195 = vector.broadcast %194 : f32 to vector<1x256xf32>
    %196 = arith.mulf %195, %170 : vector<1x256xf32>
    %197 = arith.addf %193, %196 : vector<1x256xf32>
    %c13 = arith.constant 13 : index
    %198 = memref.load %arg2[%c13] : memref<81xf32, #tpu.memory_space<smem>>
    %199 = vector.broadcast %198 : f32 to vector<1x256xf32>
    %200 = arith.mulf %199, %158 : vector<1x256xf32>
    %201 = arith.addf %197, %200 : vector<1x256xf32>
    %c14 = arith.constant 14 : index
    %202 = memref.load %arg2[%c14] : memref<81xf32, #tpu.memory_space<smem>>
    %203 = vector.broadcast %202 : f32 to vector<1x256xf32>
    %204 = arith.mulf %203, %173 : vector<1x256xf32>
    %205 = arith.addf %201, %204 : vector<1x256xf32>
    %c15 = arith.constant 15 : index
    %206 = memref.load %arg2[%c15] : memref<81xf32, #tpu.memory_space<smem>>
    %207 = vector.broadcast %206 : f32 to vector<1x256xf32>
    %208 = arith.mulf %207, %176 : vector<1x256xf32>
    %209 = arith.addf %205, %208 : vector<1x256xf32>
    %c16 = arith.constant 16 : index
    %210 = memref.load %arg2[%c16] : memref<81xf32, #tpu.memory_space<smem>>
    %211 = vector.broadcast %210 : f32 to vector<1x256xf32>
    %212 = arith.mulf %211, %179 : vector<1x256xf32>
    %213 = arith.addf %209, %212 : vector<1x256xf32>
    %c17 = arith.constant 17 : index
    %214 = memref.load %arg2[%c17] : memref<81xf32, #tpu.memory_space<smem>>
    %215 = vector.broadcast %214 : f32 to vector<1x256xf32>
    %216 = arith.mulf %215, %182 : vector<1x256xf32>
    %217 = arith.addf %213, %216 : vector<1x256xf32>
    %218 = arith.addf %84, %217 : vector<1x256xf32>
    %c36 = arith.constant 36 : index
    %219 = memref.load %arg2[%c36] : memref<81xf32, #tpu.memory_space<smem>>
    %220 = vector.broadcast %219 : f32 to vector<1x256xf32>
    %221 = arith.mulf %220, %161 : vector<1x256xf32>
    %c37 = arith.constant 37 : index
    %222 = memref.load %arg2[%c37] : memref<81xf32, #tpu.memory_space<smem>>
    %223 = vector.broadcast %222 : f32 to vector<1x256xf32>
    %224 = arith.mulf %223, %164 : vector<1x256xf32>
    %225 = arith.addf %221, %224 : vector<1x256xf32>
    %c38 = arith.constant 38 : index
    %226 = memref.load %arg2[%c38] : memref<81xf32, #tpu.memory_space<smem>>
    %227 = vector.broadcast %226 : f32 to vector<1x256xf32>
    %228 = arith.mulf %227, %167 : vector<1x256xf32>
    %229 = arith.addf %225, %228 : vector<1x256xf32>
    %c39 = arith.constant 39 : index
    %230 = memref.load %arg2[%c39] : memref<81xf32, #tpu.memory_space<smem>>
    %231 = vector.broadcast %230 : f32 to vector<1x256xf32>
    %232 = arith.mulf %231, %170 : vector<1x256xf32>
    %233 = arith.addf %229, %232 : vector<1x256xf32>
    %c40 = arith.constant 40 : index
    %234 = memref.load %arg2[%c40] : memref<81xf32, #tpu.memory_space<smem>>
    %235 = vector.broadcast %234 : f32 to vector<1x256xf32>
    %236 = arith.mulf %235, %158 : vector<1x256xf32>
    %237 = arith.addf %233, %236 : vector<1x256xf32>
    %c41 = arith.constant 41 : index
    %238 = memref.load %arg2[%c41] : memref<81xf32, #tpu.memory_space<smem>>
    %239 = vector.broadcast %238 : f32 to vector<1x256xf32>
    %240 = arith.mulf %239, %173 : vector<1x256xf32>
    %241 = arith.addf %237, %240 : vector<1x256xf32>
    %c42 = arith.constant 42 : index
    %242 = memref.load %arg2[%c42] : memref<81xf32, #tpu.memory_space<smem>>
    %243 = vector.broadcast %242 : f32 to vector<1x256xf32>
    %244 = arith.mulf %243, %176 : vector<1x256xf32>
    %245 = arith.addf %241, %244 : vector<1x256xf32>
    %c43 = arith.constant 43 : index
    %246 = memref.load %arg2[%c43] : memref<81xf32, #tpu.memory_space<smem>>
    %247 = vector.broadcast %246 : f32 to vector<1x256xf32>
    %248 = arith.mulf %247, %179 : vector<1x256xf32>
    %249 = arith.addf %245, %248 : vector<1x256xf32>
    %c44 = arith.constant 44 : index
    %250 = memref.load %arg2[%c44] : memref<81xf32, #tpu.memory_space<smem>>
    %251 = vector.broadcast %250 : f32 to vector<1x256xf32>
    %252 = arith.mulf %251, %182 : vector<1x256xf32>
    %253 = arith.addf %249, %252 : vector<1x256xf32>
    %254 = arith.addf %120, %253 : vector<1x256xf32>
    %c63 = arith.constant 63 : index
    %255 = memref.load %arg2[%c63] : memref<81xf32, #tpu.memory_space<smem>>
    %256 = vector.broadcast %255 : f32 to vector<1x256xf32>
    %257 = arith.mulf %256, %161 : vector<1x256xf32>
    %c64 = arith.constant 64 : index
    %258 = memref.load %arg2[%c64] : memref<81xf32, #tpu.memory_space<smem>>
    %259 = vector.broadcast %258 : f32 to vector<1x256xf32>
    %260 = arith.mulf %259, %164 : vector<1x256xf32>
    %261 = arith.addf %257, %260 : vector<1x256xf32>
    %c65 = arith.constant 65 : index
    %262 = memref.load %arg2[%c65] : memref<81xf32, #tpu.memory_space<smem>>
    %263 = vector.broadcast %262 : f32 to vector<1x256xf32>
    %264 = arith.mulf %263, %167 : vector<1x256xf32>
    %265 = arith.addf %261, %264 : vector<1x256xf32>
    %c66 = arith.constant 66 : index
    %266 = memref.load %arg2[%c66] : memref<81xf32, #tpu.memory_space<smem>>
    %267 = vector.broadcast %266 : f32 to vector<1x256xf32>
    %268 = arith.mulf %267, %170 : vector<1x256xf32>
    %269 = arith.addf %265, %268 : vector<1x256xf32>
    %c67 = arith.constant 67 : index
    %270 = memref.load %arg2[%c67] : memref<81xf32, #tpu.memory_space<smem>>
    %271 = vector.broadcast %270 : f32 to vector<1x256xf32>
    %272 = arith.mulf %271, %158 : vector<1x256xf32>
    %273 = arith.addf %269, %272 : vector<1x256xf32>
    %c68 = arith.constant 68 : index
    %274 = memref.load %arg2[%c68] : memref<81xf32, #tpu.memory_space<smem>>
    %275 = vector.broadcast %274 : f32 to vector<1x256xf32>
    %276 = arith.mulf %275, %173 : vector<1x256xf32>
    %277 = arith.addf %273, %276 : vector<1x256xf32>
    %c69 = arith.constant 69 : index
    %278 = memref.load %arg2[%c69] : memref<81xf32, #tpu.memory_space<smem>>
    %279 = vector.broadcast %278 : f32 to vector<1x256xf32>
    %280 = arith.mulf %279, %176 : vector<1x256xf32>
    %281 = arith.addf %277, %280 : vector<1x256xf32>
    %c70 = arith.constant 70 : index
    %282 = memref.load %arg2[%c70] : memref<81xf32, #tpu.memory_space<smem>>
    %283 = vector.broadcast %282 : f32 to vector<1x256xf32>
    %284 = arith.mulf %283, %179 : vector<1x256xf32>
    %285 = arith.addf %281, %284 : vector<1x256xf32>
    %c71 = arith.constant 71 : index
    %286 = memref.load %arg2[%c71] : memref<81xf32, #tpu.memory_space<smem>>
    %287 = vector.broadcast %286 : f32 to vector<1x256xf32>
    %288 = arith.mulf %287, %182 : vector<1x256xf32>
    %289 = arith.addf %285, %288 : vector<1x256xf32>
    %290 = arith.addf %156, %289 : vector<1x256xf32>
    %c0_36 = arith.constant 0 : index
    %c2_37 = arith.constant 2 : index
    %c0_38 = arith.constant 0 : index
    %291 = vector.load %arg1[%c0_36, %c2_37, %c0_38] : memref<1x3x256xf32, #tpu.memory_space<vmem>>, vector<1x1x256xf32>
    %292 = vector.shape_cast %291 : vector<1x1x256xf32> to vector<1x256xf32>
    %c17_i32_39 = arith.constant 17 : i32
    %293 = tpu.dynamic_rotate %292 by %c17_i32_39 dim 1 : vector<1x256xf32>, i32 -> vector<1x256xf32>
    %cst_40 = arith.constant 0.000000e+00 : f32
    %294 = vector.broadcast %cst_40 : f32 to vector<1x256xf32>
    %295 = arith.select %13, %293, %294 : vector<1x256xi1>, vector<1x256xf32>
    %c16_i32_41 = arith.constant 16 : i32
    %296 = tpu.dynamic_rotate %292 by %c16_i32_41 dim 1 : vector<1x256xf32>, i32 -> vector<1x256xf32>
    %cst_42 = arith.constant 0.000000e+00 : f32
    %297 = vector.broadcast %cst_42 : f32 to vector<1x256xf32>
    %298 = arith.select %6, %296, %297 : vector<1x256xi1>, vector<1x256xf32>
    %c15_i32_43 = arith.constant 15 : i32
    %299 = tpu.dynamic_rotate %292 by %c15_i32_43 dim 1 : vector<1x256xf32>, i32 -> vector<1x256xf32>
    %cst_44 = arith.constant 0.000000e+00 : f32
    %300 = vector.broadcast %cst_44 : f32 to vector<1x256xf32>
    %301 = arith.select %14, %299, %300 : vector<1x256xi1>, vector<1x256xf32>
    %c1_i32_45 = arith.constant 1 : i32
    %302 = tpu.dynamic_rotate %292 by %c1_i32_45 dim 1 : vector<1x256xf32>, i32 -> vector<1x256xf32>
    %cst_46 = arith.constant 0.000000e+00 : f32
    %303 = vector.broadcast %cst_46 : f32 to vector<1x256xf32>
    %304 = arith.select %10, %302, %303 : vector<1x256xi1>, vector<1x256xf32>
    %c255_i32_47 = arith.constant 255 : i32
    %305 = tpu.dynamic_rotate %292 by %c255_i32_47 dim 1 : vector<1x256xf32>, i32 -> vector<1x256xf32>
    %cst_48 = arith.constant 0.000000e+00 : f32
    %306 = vector.broadcast %cst_48 : f32 to vector<1x256xf32>
    %307 = arith.select %12, %305, %306 : vector<1x256xi1>, vector<1x256xf32>
    %c241_i32_49 = arith.constant 241 : i32
    %308 = tpu.dynamic_rotate %292 by %c241_i32_49 dim 1 : vector<1x256xf32>, i32 -> vector<1x256xf32>
    %cst_50 = arith.constant 0.000000e+00 : f32
    %309 = vector.broadcast %cst_50 : f32 to vector<1x256xf32>
    %310 = arith.select %15, %308, %309 : vector<1x256xi1>, vector<1x256xf32>
    %c240_i32_51 = arith.constant 240 : i32
    %311 = tpu.dynamic_rotate %292 by %c240_i32_51 dim 1 : vector<1x256xf32>, i32 -> vector<1x256xf32>
    %cst_52 = arith.constant 0.000000e+00 : f32
    %312 = vector.broadcast %cst_52 : f32 to vector<1x256xf32>
    %313 = arith.select %8, %311, %312 : vector<1x256xi1>, vector<1x256xf32>
    %c239_i32_53 = arith.constant 239 : i32
    %314 = tpu.dynamic_rotate %292 by %c239_i32_53 dim 1 : vector<1x256xf32>, i32 -> vector<1x256xf32>
    %cst_54 = arith.constant 0.000000e+00 : f32
    %315 = vector.broadcast %cst_54 : f32 to vector<1x256xf32>
    %316 = arith.select %16, %314, %315 : vector<1x256xi1>, vector<1x256xf32>
    %c18 = arith.constant 18 : index
    %317 = memref.load %arg2[%c18] : memref<81xf32, #tpu.memory_space<smem>>
    %318 = vector.broadcast %317 : f32 to vector<1x256xf32>
    %319 = arith.mulf %318, %295 : vector<1x256xf32>
    %c19 = arith.constant 19 : index
    %320 = memref.load %arg2[%c19] : memref<81xf32, #tpu.memory_space<smem>>
    %321 = vector.broadcast %320 : f32 to vector<1x256xf32>
    %322 = arith.mulf %321, %298 : vector<1x256xf32>
    %323 = arith.addf %319, %322 : vector<1x256xf32>
    %c20 = arith.constant 20 : index
    %324 = memref.load %arg2[%c20] : memref<81xf32, #tpu.memory_space<smem>>
    %325 = vector.broadcast %324 : f32 to vector<1x256xf32>
    %326 = arith.mulf %325, %301 : vector<1x256xf32>
    %327 = arith.addf %323, %326 : vector<1x256xf32>
    %c21 = arith.constant 21 : index
    %328 = memref.load %arg2[%c21] : memref<81xf32, #tpu.memory_space<smem>>
    %329 = vector.broadcast %328 : f32 to vector<1x256xf32>
    %330 = arith.mulf %329, %304 : vector<1x256xf32>
    %331 = arith.addf %327, %330 : vector<1x256xf32>
    %c22 = arith.constant 22 : index
    %332 = memref.load %arg2[%c22] : memref<81xf32, #tpu.memory_space<smem>>
    %333 = vector.broadcast %332 : f32 to vector<1x256xf32>
    %334 = arith.mulf %333, %292 : vector<1x256xf32>
    %335 = arith.addf %331, %334 : vector<1x256xf32>
    %c23 = arith.constant 23 : index
    %336 = memref.load %arg2[%c23] : memref<81xf32, #tpu.memory_space<smem>>
    %337 = vector.broadcast %336 : f32 to vector<1x256xf32>
    %338 = arith.mulf %337, %307 : vector<1x256xf32>
    %339 = arith.addf %335, %338 : vector<1x256xf32>
    %c24 = arith.constant 24 : index
    %340 = memref.load %arg2[%c24] : memref<81xf32, #tpu.memory_space<smem>>
    %341 = vector.broadcast %340 : f32 to vector<1x256xf32>
    %342 = arith.mulf %341, %310 : vector<1x256xf32>
    %343 = arith.addf %339, %342 : vector<1x256xf32>
    %c25 = arith.constant 25 : index
    %344 = memref.load %arg2[%c25] : memref<81xf32, #tpu.memory_space<smem>>
    %345 = vector.broadcast %344 : f32 to vector<1x256xf32>
    %346 = arith.mulf %345, %313 : vector<1x256xf32>
    %347 = arith.addf %343, %346 : vector<1x256xf32>
    %c26 = arith.constant 26 : index
    %348 = memref.load %arg2[%c26] : memref<81xf32, #tpu.memory_space<smem>>
    %349 = vector.broadcast %348 : f32 to vector<1x256xf32>
    %350 = arith.mulf %349, %316 : vector<1x256xf32>
    %351 = arith.addf %347, %350 : vector<1x256xf32>
    %352 = arith.addf %218, %351 : vector<1x256xf32>
    %c45 = arith.constant 45 : index
    %353 = memref.load %arg2[%c45] : memref<81xf32, #tpu.memory_space<smem>>
    %354 = vector.broadcast %353 : f32 to vector<1x256xf32>
    %355 = arith.mulf %354, %295 : vector<1x256xf32>
    %c46 = arith.constant 46 : index
    %356 = memref.load %arg2[%c46] : memref<81xf32, #tpu.memory_space<smem>>
    %357 = vector.broadcast %356 : f32 to vector<1x256xf32>
    %358 = arith.mulf %357, %298 : vector<1x256xf32>
    %359 = arith.addf %355, %358 : vector<1x256xf32>
    %c47 = arith.constant 47 : index
    %360 = memref.load %arg2[%c47] : memref<81xf32, #tpu.memory_space<smem>>
    %361 = vector.broadcast %360 : f32 to vector<1x256xf32>
    %362 = arith.mulf %361, %301 : vector<1x256xf32>
    %363 = arith.addf %359, %362 : vector<1x256xf32>
    %c48 = arith.constant 48 : index
    %364 = memref.load %arg2[%c48] : memref<81xf32, #tpu.memory_space<smem>>
    %365 = vector.broadcast %364 : f32 to vector<1x256xf32>
    %366 = arith.mulf %365, %304 : vector<1x256xf32>
    %367 = arith.addf %363, %366 : vector<1x256xf32>
    %c49 = arith.constant 49 : index
    %368 = memref.load %arg2[%c49] : memref<81xf32, #tpu.memory_space<smem>>
    %369 = vector.broadcast %368 : f32 to vector<1x256xf32>
    %370 = arith.mulf %369, %292 : vector<1x256xf32>
    %371 = arith.addf %367, %370 : vector<1x256xf32>
    %c50 = arith.constant 50 : index
    %372 = memref.load %arg2[%c50] : memref<81xf32, #tpu.memory_space<smem>>
    %373 = vector.broadcast %372 : f32 to vector<1x256xf32>
    %374 = arith.mulf %373, %307 : vector<1x256xf32>
    %375 = arith.addf %371, %374 : vector<1x256xf32>
    %c51 = arith.constant 51 : index
    %376 = memref.load %arg2[%c51] : memref<81xf32, #tpu.memory_space<smem>>
    %377 = vector.broadcast %376 : f32 to vector<1x256xf32>
    %378 = arith.mulf %377, %310 : vector<1x256xf32>
    %379 = arith.addf %375, %378 : vector<1x256xf32>
    %c52 = arith.constant 52 : index
    %380 = memref.load %arg2[%c52] : memref<81xf32, #tpu.memory_space<smem>>
    %381 = vector.broadcast %380 : f32 to vector<1x256xf32>
    %382 = arith.mulf %381, %313 : vector<1x256xf32>
    %383 = arith.addf %379, %382 : vector<1x256xf32>
    %c53 = arith.constant 53 : index
    %384 = memref.load %arg2[%c53] : memref<81xf32, #tpu.memory_space<smem>>
    %385 = vector.broadcast %384 : f32 to vector<1x256xf32>
    %386 = arith.mulf %385, %316 : vector<1x256xf32>
    %387 = arith.addf %383, %386 : vector<1x256xf32>
    %388 = arith.addf %254, %387 : vector<1x256xf32>
    %c72 = arith.constant 72 : index
    %389 = memref.load %arg2[%c72] : memref<81xf32, #tpu.memory_space<smem>>
    %390 = vector.broadcast %389 : f32 to vector<1x256xf32>
    %391 = arith.mulf %390, %295 : vector<1x256xf32>
    %c73 = arith.constant 73 : index
    %392 = memref.load %arg2[%c73] : memref<81xf32, #tpu.memory_space<smem>>
    %393 = vector.broadcast %392 : f32 to vector<1x256xf32>
    %394 = arith.mulf %393, %298 : vector<1x256xf32>
    %395 = arith.addf %391, %394 : vector<1x256xf32>
    %c74 = arith.constant 74 : index
    %396 = memref.load %arg2[%c74] : memref<81xf32, #tpu.memory_space<smem>>
    %397 = vector.broadcast %396 : f32 to vector<1x256xf32>
    %398 = arith.mulf %397, %301 : vector<1x256xf32>
    %399 = arith.addf %395, %398 : vector<1x256xf32>
    %c75 = arith.constant 75 : index
    %400 = memref.load %arg2[%c75] : memref<81xf32, #tpu.memory_space<smem>>
    %401 = vector.broadcast %400 : f32 to vector<1x256xf32>
    %402 = arith.mulf %401, %304 : vector<1x256xf32>
    %403 = arith.addf %399, %402 : vector<1x256xf32>
    %c76 = arith.constant 76 : index
    %404 = memref.load %arg2[%c76] : memref<81xf32, #tpu.memory_space<smem>>
    %405 = vector.broadcast %404 : f32 to vector<1x256xf32>
    %406 = arith.mulf %405, %292 : vector<1x256xf32>
    %407 = arith.addf %403, %406 : vector<1x256xf32>
    %c77 = arith.constant 77 : index
    %408 = memref.load %arg2[%c77] : memref<81xf32, #tpu.memory_space<smem>>
    %409 = vector.broadcast %408 : f32 to vector<1x256xf32>
    %410 = arith.mulf %409, %307 : vector<1x256xf32>
    %411 = arith.addf %407, %410 : vector<1x256xf32>
    %c78 = arith.constant 78 : index
    %412 = memref.load %arg2[%c78] : memref<81xf32, #tpu.memory_space<smem>>
    %413 = vector.broadcast %412 : f32 to vector<1x256xf32>
    %414 = arith.mulf %413, %310 : vector<1x256xf32>
    %415 = arith.addf %411, %414 : vector<1x256xf32>
    %c79 = arith.constant 79 : index
    %416 = memref.load %arg2[%c79] : memref<81xf32, #tpu.memory_space<smem>>
    %417 = vector.broadcast %416 : f32 to vector<1x256xf32>
    %418 = arith.mulf %417, %313 : vector<1x256xf32>
    %419 = arith.addf %415, %418 : vector<1x256xf32>
    %c80 = arith.constant 80 : index
    %420 = memref.load %arg2[%c80] : memref<81xf32, #tpu.memory_space<smem>>
    %421 = vector.broadcast %420 : f32 to vector<1x256xf32>
    %422 = arith.mulf %421, %316 : vector<1x256xf32>
    %423 = arith.addf %419, %422 : vector<1x256xf32>
    %424 = arith.addf %290, %423 : vector<1x256xf32>
    %425 = arith.addf %352, %388 : vector<1x256xf32>
    %426 = arith.addf %425, %424 : vector<1x256xf32>
    %cst_55 = arith.constant 0.333333343 : f32
    %427 = vector.broadcast %cst_55 : f32 to vector<1x256xf32>
    %428 = arith.mulf %426, %427 : vector<1x256xf32>
    %429 = arith.subf %352, %428 : vector<1x256xf32>
    %430 = arith.subf %388, %428 : vector<1x256xf32>
    %431 = arith.subf %424, %428 : vector<1x256xf32>
    %432 = arith.mulf %429, %429 : vector<1x256xf32>
    %433 = arith.mulf %430, %430 : vector<1x256xf32>
    %434 = arith.addf %432, %433 : vector<1x256xf32>
    %435 = arith.mulf %431, %431 : vector<1x256xf32>
    %436 = arith.addf %434, %435 : vector<1x256xf32>
    %cst_56 = arith.constant 0.333333343 : f32
    %437 = vector.broadcast %cst_56 : f32 to vector<1x256xf32>
    %438 = arith.mulf %436, %437 : vector<1x256xf32>
    %cst_57 = arith.constant 9.99999974E-6 : f32
    %439 = vector.broadcast %cst_57 : f32 to vector<1x256xf32>
    %440 = arith.addf %438, %439 : vector<1x256xf32>
    %441 = math.rsqrt %440 : vector<1x256xf32>
    %c0_58 = arith.constant 0 : index
    %442 = memref.load %arg4[%c0_58] : memref<3xf32, #tpu.memory_space<smem>>
    %443 = vector.broadcast %442 : f32 to vector<1x256xf32>
    %444 = arith.mulf %441, %443 : vector<1x256xf32>
    %445 = arith.mulf %429, %444 : vector<1x256xf32>
    %c0_59 = arith.constant 0 : index
    %446 = memref.load %arg5[%c0_59] : memref<3xf32, #tpu.memory_space<smem>>
    %447 = vector.broadcast %446 : f32 to vector<1x256xf32>
    %448 = arith.addf %445, %447 : vector<1x256xf32>
    %cst_60 = arith.constant 0.000000e+00 : f32
    %449 = vector.broadcast %cst_60 : f32 to vector<1x256xf32>
    %450 = arith.maximumf %448, %449 : vector<1x256xf32>
    %c0_61 = arith.constant 0 : index
    %c0_62 = arith.constant 0 : index
    %c0_63 = arith.constant 0 : index
    %451 = vector.load %arg6[%c0_61, %c0_62, %c0_63] : memref<1x3x256xf32, #tpu.memory_space<vmem>>, vector<1x1x256xf32>
    %452 = vector.shape_cast %451 : vector<1x1x256xf32> to vector<1x256xf32>
    %453 = vector.shape_cast %450 : vector<1x256xf32> to vector<1x1x256xf32>
    tpu.vector_store %arg6[%c0_61, %c0_62, %c0_63], %453 {strides = array<i32>} : memref<1x3x256xf32, #tpu.memory_space<vmem>>, vector<1x1x256xf32>,
    %c1_64 = arith.constant 1 : index
    %454 = memref.load %arg4[%c1_64] : memref<3xf32, #tpu.memory_space<smem>>
    %455 = vector.broadcast %454 : f32 to vector<1x256xf32>
    %456 = arith.mulf %441, %455 : vector<1x256xf32>
    %457 = arith.mulf %430, %456 : vector<1x256xf32>
    %c1_65 = arith.constant 1 : index
    %458 = memref.load %arg5[%c1_65] : memref<3xf32, #tpu.memory_space<smem>>
    %459 = vector.broadcast %458 : f32 to vector<1x256xf32>
    %460 = arith.addf %457, %459 : vector<1x256xf32>
    %cst_66 = arith.constant 0.000000e+00 : f32
    %461 = vector.broadcast %cst_66 : f32 to vector<1x256xf32>
    %462 = arith.maximumf %460, %461 : vector<1x256xf32>
    %c0_67 = arith.constant 0 : index
    %c1_68 = arith.constant 1 : index
    %c0_69 = arith.constant 0 : index
    %463 = vector.load %arg6[%c0_67, %c1_68, %c0_69] : memref<1x3x256xf32, #tpu.memory_space<vmem>>, vector<1x1x256xf32>
    %464 = vector.shape_cast %463 : vector<1x1x256xf32> to vector<1x256xf32>
    %465 = vector.shape_cast %462 : vector<1x256xf32> to vector<1x1x256xf32>
    tpu.vector_store %arg6[%c0_67, %c1_68, %c0_69], %465 {strides = array<i32>} : memref<1x3x256xf32, #tpu.memory_space<vmem>>, vector<1x1x256xf32>,
    %c2_70 = arith.constant 2 : index
    %466 = memref.load %arg4[%c2_70] : memref<3xf32, #tpu.memory_space<smem>>
    %467 = vector.broadcast %466 : f32 to vector<1x256xf32>
    %468 = arith.mulf %441, %467 : vector<1x256xf32>
    %469 = arith.mulf %431, %468 : vector<1x256xf32>
    %c2_71 = arith.constant 2 : index
    %470 = memref.load %arg5[%c2_71] : memref<3xf32, #tpu.memory_space<smem>>
    %471 = vector.broadcast %470 : f32 to vector<1x256xf32>
    %472 = arith.addf %469, %471 : vector<1x256xf32>
    %cst_72 = arith.constant 0.000000e+00 : f32
    %473 = vector.broadcast %cst_72 : f32 to vector<1x256xf32>
    %474 = arith.maximumf %472, %473 : vector<1x256xf32>
    %c0_73 = arith.constant 0 : index
    %c2_74 = arith.constant 2 : index
    %c0_75 = arith.constant 0 : index
    %475 = vector.load %arg6[%c0_73, %c2_74, %c0_75] : memref<1x3x256xf32, #tpu.memory_space<vmem>>, vector<1x1x256xf32>
    %476 = vector.shape_cast %475 : vector<1x1x256xf32> to vector<1x256xf32>
    %477 = vector.shape_cast %474 : vector<1x256xf32> to vector<1x1x256xf32>
    tpu.vector_store %arg6[%c0_73, %c2_74, %c0_75], %477 {strides = array<i32>} : memref<1x3x256xf32, #tpu.memory_space<vmem>>, vector<1x1x256xf32>,
    return
  }
  func.func @transform_0(%arg0: i32) -> (i32, i32, i32) {
    %c0_i32 = arith.constant 0 : i32
    %c0_i32_0 = arith.constant 0 : i32
    %c0_i32_1 = arith.constant 0 : i32
    return %arg0, %c0_i32, %c0_i32_0 : i32, i32, i32
  }
  func.func @transform_1(%arg0: i32) -> i32 {
    %c0_i32 = arith.constant 0 : i32
    %c0_i32_0 = arith.constant 0 : i32
    return %c0_i32 : i32
  }
  func.func @transform_2(%arg0: i32) -> i32 {
    %c0_i32 = arith.constant 0 : i32
    %c0_i32_0 = arith.constant 0 : i32
    return %c0_i32 : i32
  }
  func.func @transform_3(%arg0: i32) -> i32 {
    %c0_i32 = arith.constant 0 : i32
    %c0_i32_0 = arith.constant 0 : i32
    return %c0_i32 : i32
  }
  func.func @transform_4(%arg0: i32) -> i32 {
    %c0_i32 = arith.constant 0 : i32
    %c0_i32_0 = arith.constant 0 : i32
    return %c0_i32 : i32
  }
  func.func @transform_5(%arg0: i32) -> (i32, i32, i32) {
    %c0_i32 = arith.constant 0 : i32
    %c0_i32_0 = arith.constant 0 : i32
    %c0_i32_1 = arith.constant 0 : i32
    return %arg0, %c0_i32, %c0_i32_0 : i32, i32, i32
  }
}

</mosaic_0001>

<llo_original>
// kernel: tpu_custom_call.1
$region0: #{tpu_custom_call.1}
  #allocation0 [shape = 'u32[]', space=smem, size = 0x4, offset = 0x4, fixed_abs, tag = 'smem constant byte address 0x4 - core index']
  #allocation1 [shape = 'u32[72,128]{1,0:T(1,128)}', space=vmem, size = 0x9000, scoped, tag = 'internal scratch']
  %s0 = inlined_call_operand.vmem [shape: f32[2,3,256], index: 0, kind: input, shape index: {}]
  %s1 = inlined_call_operand.vmem [shape: f32[81], index: 1, kind: input, shape index: {}]
  %s2 = inlined_call_operand.vmem [shape: f32[3], index: 2, kind: input, shape index: {}]
  %s3 = inlined_call_operand.vmem [shape: f32[3], index: 3, kind: input, shape index: {}]
  %s4 = inlined_call_operand.vmem [shape: f32[3], index: 4, kind: input, shape index: {}]
  %s5 = inlined_call_operand.vmem [shape: f32[2,3,256], index: 5, kind: output, shape index: {}]
  %s6 = sld [smem:[#allocation0]]
  $region69: #{tpu_custom_call.1} parent=0
    _
  %s8 = ssub.s32 1, %s6
  %s9 = scalar_select 0, %s8, %s6
  $region1: #{tpu_custom_call.1} parent=0
    #allocation2 [shape = 'u8[512]{0}', space=smem, size = 0x200, scoped, tag = 'input window, operand 1, single buffered']
    #allocation3 [shape = 's32[2]{0}', space=sflag, size = 0x8, scoped, tag = 'scoped memory for tpu_custom_call.1']
    #allocation4 [shape = 'u8[512]{0}', space=smem, size = 0x200, scoped, tag = 'input window, operand 2, single buffered']
    #allocation5 [shape = 's32[1]{0}', space=sflag, size = 0x4, scoped, tag = 'scoped memory for tpu_custom_call.1']
    #allocation6 [shape = 'u8[512]{0}', space=smem, size = 0x200, scoped, tag = 'input window, operand 3, single buffered']
    #allocation7 [shape = 'u8[512]{0}', space=smem, size = 0x200, scoped, tag = 'input window, operand 4, single buffered']
    #allocation8 [shape = 's32[1]{0}', space=sflag, size = 0x4, scoped, tag = 'scoped memory for tpu_custom_call.1']
    %10 = vsyncpa [#allocation3], 0
    %11 = vsyncpa [#allocation5], 0
    %12 = vsyncpa [#allocation8], 0
    loop: start=0, step=1, limit=4
    $region2: #{tpu_custom_call.1} parent=1 // loop_pre_header
      _
    $region3: #{tpu_custom_call.1} parent=1 // loop_header
      %s14 = sphi 0, %s18
      %p15 = scmp.ge.s32.totalorder %s14, 4
      %s24 = sphi 0, %s26
      %s27 = sphi 0, %s24
      %s28 = sphi 0, %s27
      %s44 = sphi 0, %s28
      %s48 = sphi 0, %s48
      %s50 = sphi 0, %s48
      %s51 = sphi 0, %s50
      %s65 = sphi 0, %s51
      %s69 = sphi 0, %s69
      %s71 = sphi 0, %s69
      %s72 = sphi 0, %s71
      %s86 = sphi 0, %s72
      %s90 = sphi 0, %s90
      %s92 = sphi 0, %s90
      %s93 = sphi 0, %s92
      %s107 = sphi 0, %s93
      %s111 = sphi 0, %s111
      %s113 = sphi 0, %s111
      %s114 = sphi 0, %s113
      %s128 = sphi 0, %s114
      %s134 = sphi 0, %s136
      %s137 = sphi 0, %s134
      %s138 = sphi 0, %s137
      %s154 = sphi 0, %s138
    $region4: #{tpu_custom_call.1} parent=1 // loop_header_branch
      %17 = sbr.rel (%p15) target = $region8
    $region5: #{tpu_custom_call.1} parent=1 // loop_body
      %s19 = ssub.s32 %s14, 1
      %s20 = ssub.s32 %s14, 2
      %s21 = sadd.s32 %s14, 1
      %s22 = ssub.s32 %s14, %s21
      %p23 = scmp.eq.s32.totalorder %s22, 0
      %s25 = sadd.s32 %s24, 1
      %s26 = scalar_select %p23, %s24, %s25
      %p29 = pneg %p23
      %p30 = scmp.eq.s32.totalorder %s14, 1
      %p31 = por %p29, %p30
      %p32 = scmp.ne.s32.totalorder %s24, %s27
      %p33 = scmp.eq.s32.totalorder %s14, 0
      %p34 = por %p32, %p33
      %p35 = scmp.ne.s32.totalorder %s24, %s27
      %p36 = scmp.eq.s32.totalorder %s19, 1
      %p37 = por %p35, %p36
      %p38 = scmp.ne.s32.totalorder %s27, %s28
      %p39 = scmp.eq.s32.totalorder %s19, 0
      %p40 = por %p38, %p39
      %p41 = scmp.ne.s32.totalorder %s27, %s28
      %p42 = scmp.eq.s32.totalorder %s20, 1
      %p43 = por %p41, %p42
      %p45 = scmp.ne.s32.totalorder %s28, %s44
      %p46 = scmp.eq.s32.totalorder %s20, 0
      %p47 = por %p45, %p46
      %s49 = sadd.s32 %s48, 1
      %p52 = scmp.eq.s32.totalorder %s14, 1
      %p53 = scmp.ne.s32.totalorder %s48, %s50
      %p54 = scmp.eq.s32.totalorder %s14, 0
      %p55 = por %p53, %p54
      %p56 = scmp.ne.s32.totalorder %s48, %s50
      %p57 = scmp.eq.s32.totalorder %s19, 1
      %p58 = por %p56, %p57
      %p59 = scmp.ne.s32.totalorder %s50, %s51
      %p60 = scmp.eq.s32.totalorder %s19, 0
      %p61 = por %p59, %p60
      %p62 = scmp.ne.s32.totalorder %s50, %s51
      %p63 = scmp.eq.s32.totalorder %s20, 1
      %p64 = por %p62, %p63
      %p66 = scmp.ne.s32.totalorder %s51, %s65
      %p67 = scmp.eq.s32.totalorder %s20, 0
      %p68 = por %p66, %p67
      %s70 = sadd.s32 %s69, 1
      %p73 = scmp.eq.s32.totalorder %s14, 1
      %p74 = scmp.ne.s32.totalorder %s69, %s71
      %p75 = scmp.eq.s32.totalorder %s14, 0
      %p76 = por %p74, %p75
      %p77 = scmp.ne.s32.totalorder %s69, %s71
      %p78 = scmp.eq.s32.totalorder %s19, 1
      %p79 = por %p77, %p78
      %p80 = scmp.ne.s32.totalorder %s71, %s72
      %p81 = scmp.eq.s32.totalorder %s19, 0
      %p82 = por %p80, %p81
      %p83 = scmp.ne.s32.totalorder %s71, %s72
      %p84 = scmp.eq.s32.totalorder %s20, 1
      %p85 = por %p83, %p84
      %p87 = scmp.ne.s32.totalorder %s72, %s86
      %p88 = scmp.eq.s32.totalorder %s20, 0
      %p89 = por %p87, %p88
      %s91 = sadd.s32 %s90, 1
      %p94 = scmp.eq.s32.totalorder %s14, 1
      %p95 = scmp.ne.s32.totalorder %s90, %s92
      %p96 = scmp.eq.s32.totalorder %s14, 0
      %p97 = por %p95, %p96
      %p98 = scmp.ne.s32.totalorder %s90, %s92
      %p99 = scmp.eq.s32.totalorder %s19, 1
      %p100 = por %p98, %p99
      %p101 = scmp.ne.s32.totalorder %s92, %s93
      %p102 = scmp.eq.s32.totalorder %s19, 0
      %p103 = por %p101, %p102
      %p104 = scmp.ne.s32.totalorder %s92, %s93
      %p105 = scmp.eq.s32.totalorder %s20, 1
      %p106 = por %p104, %p105
      %p108 = scmp.ne.s32.totalorder %s93, %s107
      %p109 = scmp.eq.s32.totalorder %s20, 0
      %p110 = por %p108, %p109
      %s112 = sadd.s32 %s111, 1
      %p115 = scmp.eq.s32.totalorder %s14, 1
      %p116 = scmp.ne.s32.totalorder %s111, %s113
      %p117 = scmp.eq.s32.totalorder %s14, 0
      %p118 = por %p116, %p117
      %p119 = scmp.ne.s32.totalorder %s111, %s113
      %p120 = scmp.eq.s32.totalorder %s19, 1
      %p121 = por %p119, %p120
      %p122 = scmp.ne.s32.totalorder %s113, %s114
      %p123 = scmp.eq.s32.totalorder %s19, 0
      %p124 = por %p122, %p123
      %p125 = scmp.ne.s32.totalorder %s113, %s114
      %p126 = scmp.eq.s32.totalorder %s20, 1
      %p127 = por %p125, %p126
      %p129 = scmp.ne.s32.totalorder %s114, %s128
      %p130 = scmp.eq.s32.totalorder %s20, 0
      %p131 = por %p129, %p130
      %s132 = ssub.s32 %s14, %s21
      %p133 = scmp.eq.s32.totalorder %s132, 0
      %s135 = sadd.s32 %s134, 1
      %s136 = scalar_select %p133, %s134, %s135
      %p139 = pneg %p133
      %p140 = scmp.eq.s32.totalorder %s14, 1
      %p141 = por %p139, %p140
      %p142 = scmp.ne.s32.totalorder %s134, %s137
      %p143 = scmp.eq.s32.totalorder %s14, 0
      %p144 = por %p142, %p143
      %p145 = scmp.ne.s32.totalorder %s134, %s137
      %p146 = scmp.eq.s32.totalorder %s19, 1
      %p147 = por %p145, %p146
      %p148 = scmp.ne.s32.totalorder %s137, %s138
      %p149 = scmp.eq.s32.totalorder %s19, 0
      %p150 = por %p148, %p149
      %p151 = scmp.ne.s32.totalorder %s137, %s138
      %p152 = scmp.eq.s32.totalorder %s20, 1
      %p153 = por %p151, %p152
      %p155 = scmp.ne.s32.totalorder %s138, %s154
      %p156 = scmp.eq.s32.totalorder %s20, 0
      %p157 = por %p155, %p156
      %p158 = scmp.le.s32.totalorder 1, %s14
      %p159 = scmp.lt.s32.totalorder %s14, 3
      %p160 = pnand %p158, %p159
      %p161 = pneg %p160
      // Predicated region
      $region9: #{tpu_custom_call.1} parent=5 // pred_check
        _
      $region10: #{tpu_custom_call.1} parent=5 // pred_check_branch
        %163 = sbr.rel (%p160) target = $region12
      $region11: #{tpu_custom_call.1} parent=5 // pred_region
        %s164 = ssub.s32 %s14, 1
        // Predicated region
        $region13: #{tpu_custom_call.1} parent=11 // pred_check
          %p165 = pneg %p61
        $region14: #{tpu_custom_call.1} parent=11 // pred_check_branch
          %167 = sbr.rel (%p165) target = $region16
        $region15: #{tpu_custom_call.1} parent=11 // pred_region
          %169 = vsyncadd [#allocation3], 0
          %s171 = sshll.u32 %s1, 4
          %s172 = int_to_ptr.vmem [resolvable:$true] %s171
          %174 = dma.vmem_to_smem %s172, 16, [#allocation2], [#allocation3]
        $region16: #{tpu_custom_call.1} parent=11 // pred_fallthru
          _
        // Predicated region
        $region17: #{tpu_custom_call.1} parent=11 // pred_check
          %p175 = pneg %p82
        $region18: #{tpu_custom_call.1} parent=11 // pred_check_branch
          %177 = sbr.rel (%p175) target = $region20
        $region19: #{tpu_custom_call.1} parent=11 // pred_region
          %179 = vsyncadd [#allocation5], 0
          %s181 = sshll.u32 %s2, 4
          %s182 = int_to_ptr.vmem [resolvable:$true] %s181
          %184 = dma.vmem_to_smem %s182, 16, [#allocation4], [#allocation5]
        $region20: #{tpu_custom_call.1} parent=11 // pred_fallthru
          _
        // Predicated region
        $region21: #{tpu_custom_call.1} parent=11 // pred_check
          %p185 = pneg %p103
        $region22: #{tpu_custom_call.1} parent=11 // pred_check_branch
          %187 = sbr.rel (%p185) target = $region24
        $region23: #{tpu_custom_call.1} parent=11 // pred_region
          %189 = vsyncadd [#allocation5], 0
          %s191 = sshll.u32 %s3, 4
          %s192 = int_to_ptr.vmem [resolvable:$true] %s191
          %194 = dma.vmem_to_smem %s192, 16, [#allocation6], [#allocation5]
        $region24: #{tpu_custom_call.1} parent=11 // pred_fallthru
          _
        // Predicated region
        $region25: #{tpu_custom_call.1} parent=11 // pred_check
          %p195 = pneg %p124
        $region26: #{tpu_custom_call.1} parent=11 // pred_check_branch
          %197 = sbr.rel (%p195) target = $region28
        $region27: #{tpu_custom_call.1} parent=11 // pred_region
          %199 = vsyncadd [#allocation8], 0
          %s201 = sshll.u32 %s4, 4
          %s202 = int_to_ptr.vmem [resolvable:$true] %s201
          %204 = dma.vmem_to_smem %s202, 16, [#allocation7], [#allocation8]
        $region28: #{tpu_custom_call.1} parent=11 // pred_fallthru
          _
      $region12: #{tpu_custom_call.1} parent=5 // pred_fallthru
        _
      %p205 = scmp.lt.s32.totalorder %s14, 2
      // Predicated region
      $region29: #{tpu_custom_call.1} parent=5 // pred_check
        %p206 = pneg %p205
      $region30: #{tpu_custom_call.1} parent=5 // pred_check_branch
        %208 = sbr.rel (%p206) target = $region32
      $region31: #{tpu_custom_call.1} parent=5 // pred_region
        // Predicated region
        $region33: #{tpu_custom_call.1} parent=31 // pred_check
          %p209 = pneg %p34
        $region34: #{tpu_custom_call.1} parent=31 // pred_check_branch
          %211 = sbr.rel (%p209) target = $region36
        $region35: #{tpu_custom_call.1} parent=31 // pred_region
          %p212 = scmp.lt.s32.totalorder %s14, 1
          %s213 = scalar_select %p212, %s14, 1
          %s214 = smul.addr %s213, 2
          %s215 = smul.addr %s214, 4
          %s216 = scalar_lea.vmem %s0, %s215
        $region36: #{tpu_custom_call.1} parent=31 // pred_fallthru
          _
      $region32: #{tpu_custom_call.1} parent=5 // pred_fallthru
        _
      %p217 = scmp.le.s32.totalorder 1, %s14
      %p218 = scmp.lt.s32.totalorder %s14, 3
      %p219 = pnand %p217, %p218
      %p220 = pneg %p219
      // Predicated region
      $region37: #{tpu_custom_call.1} parent=5 // pred_check
        _
      $region38: #{tpu_custom_call.1} parent=5 // pred_check_branch
        %222 = sbr.rel (%p219) target = $region40
      $region39: #{tpu_custom_call.1} parent=5 // pred_region
        %s223 = ssub.s32 %s14, 1
        // Predicated region
        $region41: #{tpu_custom_call.1} parent=39 // pred_check
          %p224 = pneg %p61
        $region42: #{tpu_custom_call.1} parent=39 // pred_check_branch
          %226 = sbr.rel (%p224) target = $region44
        $region43: #{tpu_custom_call.1} parent=39 // pred_region
          %228 = dma.done [#allocation3], 16
        $region44: #{tpu_custom_call.1} parent=39 // pred_fallthru
          _
        // Predicated region
        $region45: #{tpu_custom_call.1} parent=39 // pred_check
          %p229 = pneg %p82
        $region46: #{tpu_custom_call.1} parent=39 // pred_check_branch
          %231 = sbr.rel (%p229) target = $region48
        $region47: #{tpu_custom_call.1} parent=39 // pred_region
          %233 = dma.done [#allocation5], 16
        $region48: #{tpu_custom_call.1} parent=39 // pred_fallthru
          _
        // Predicated region
        $region49: #{tpu_custom_call.1} parent=39 // pred_check
          %p234 = pneg %p103
        $region50: #{tpu_custom_call.1} parent=39 // pred_check_branch
          %236 = sbr.rel (%p234) target = $region52
        $region51: #{tpu_custom_call.1} parent=39 // pred_region
          %238 = dma.done [#allocation5], 16
        $region52: #{tpu_custom_call.1} parent=39 // pred_fallthru
          _
        // Predicated region
        $region53: #{tpu_custom_call.1} parent=39 // pred_check
          %p239 = pneg %p124
        $region54: #{tpu_custom_call.1} parent=39 // pred_check_branch
          %241 = sbr.rel (%p239) target = $region56
        $region55: #{tpu_custom_call.1} parent=39 // pred_region
          %243 = dma.done [#allocation8], 16
        $region56: #{tpu_custom_call.1} parent=39 // pred_fallthru
          _
        %244 = sfence
        %p245 = scmp.lt.s32.totalorder %s19, 1
        %s246 = scalar_select %p245, %s19, 1
        %s247 = smul.addr %s246, 2
        %s248 = smul.addr %s247, 4
        %s249 = scalar_lea.vmem %s0, %s248
        %p250 = pneg %p40
        %p251 = pneg %p37
        %p252 = pneg %p61
        %p253 = pneg %p58
        %p254 = pneg %p82
        %p255 = pneg %p79
        %p256 = pneg %p103
        %p257 = pneg %p100
        %p258 = pneg %p124
        %p259 = pneg %p121
        %p260 = pneg %p150
        %p261 = pneg %p147
        %p262 = scmp.lt.s32.totalorder %s19, 1
        %s263 = scalar_select %p262, %s19, 1
        %s264 = smul.addr %s263, 2
        %s265 = smul.addr %s264, 4
        %s266 = scalar_lea.vmem %s5, %s265
        %p267 = scmp.lt.s32.totalorder %s19, 1
        %s268 = scalar_select %p267, %s19, 1
        %s269 = smul.addr %s268, 2
        %s270 = smul.addr %s269, 4
        %s271 = scalar_lea.vmem %s0, %s270
        %p272 = scmp.lt.s32.totalorder %s19, 1
        %s273 = scalar_select %p272, %s19, 1
        %s274 = smul.addr %s273, 2
        %s275 = smul.addr %s274, 4
        %s276 = scalar_lea.vmem %s5, %s275
        %v277 = vlaneseq
        %v278 = vand.u32 %v277, 127
        %v279 = vadd.s32 %v278, 128
        %v280 = vshrl.u32 %v278, 4
        %v281 = vshrl.u32 %v279, 4
        %v282 = vand.u32 %v278, 15
        %v283 = vand.u32 %v279, 15
        %vm284 = vcmp.ge.s32.totalorder %v280, 1
        %vm285 = vcmp.ge.s32.totalorder %v281, 1
        %vm286 = vcmp.le.s32.totalorder %v280, 14
        %vm287 = vcmp.le.s32.totalorder %v281, 14
        %vm288 = vcmp.ge.s32.totalorder %v282, 1
        %vm289 = vcmp.ge.s32.totalorder %v283, 1
        %vm290 = vcmp.le.s32.totalorder %v282, 14
        %vm291 = vcmp.le.s32.totalorder %v283, 14
        %vm292 = vmand %vm284, %vm288
        %vm293 = vmand %vm285, %vm289
        %vm294 = vmand %vm284, %vm290
        %vm295 = vmand %vm285, %vm291
        %vm296 = vmand %vm286, %vm288
        %vm297 = vmand %vm287, %vm289
        %vm298 = vmand %vm286, %vm290
        %vm299 = vmand %vm287, %vm291
        %s300 = sld [smem:[#allocation4]]
        %v301 = vstv %s300
        %s302 = sld [smem:[#allocation4 + $0x1]]
        %v303 = vstv %s302
        %s304 = sld [smem:[#allocation4 + $0x2]]
        %v305 = vstv %s304
        %v306 = vld [vmem:[%s271] ss:$4 sm:$0x3]
        %v308 = vperm.slane %v306, 0
        %v309 = vperm.slane %v306, 1
        %312 = vrot.lane.b32.xlu0 %v308, 17
        %v313 = vpop.permute.xlu0 %312
        %314 = vrot.lane.b32.xlu0 %v309, 17
        %v315 = vpop.permute.xlu0 %314
        %vm316 = vcmp.lt.s32.totalorder %v278, 17
        %v317 = vsel %vm316, %v313, %v315
        %v318 = vsel %vm316, %v315, %v313
        %v319 = vsel %vm292, %v318, 0.0
        %v320 = vsel %vm293, %v317, 0.0
        %321 = vrot.lane.b32.xlu0 %v308, 16
        %v322 = vpop.permute.xlu0 %321
        %323 = vrot.lane.b32.xlu0 %v309, 16
        %v324 = vpop.permute.xlu0 %323
        %vm325 = vcmp.lt.s32.totalorder %v278, 16
        %v326 = vsel %vm325, %v322, %v324
        %v327 = vsel %vm325, %v324, %v322
        %v328 = vsel %vm284, %v327, 0.0
        %v329 = vsel %vm285, %v326, 0.0
        %330 = vrot.lane.b32.xlu0 %v308, 15
        %v331 = vpop.permute.xlu0 %330
        %332 = vrot.lane.b32.xlu0 %v309, 15
        %v333 = vpop.permute.xlu0 %332
        %vm334 = vcmp.lt.s32.totalorder %v278, 15
        %v335 = vsel %vm334, %v331, %v333
        %v336 = vsel %vm334, %v333, %v331
        %v337 = vsel %vm294, %v336, 0.0
        %v338 = vsel %vm295, %v335, 0.0
        %339 = vrot.lane.b32.xlu0 %v308, 1
        %v340 = vpop.permute.xlu0 %339
        %341 = vrot.lane.b32.xlu0 %v309, 1
        %v342 = vpop.permute.xlu0 %341
        %vm343 = vcmp.lt.s32.totalorder %v278, 1
        %v344 = vsel %vm343, %v340, %v342
        %v345 = vsel %vm343, %v342, %v340
        %v346 = vsel %vm288, %v345, 0.0
        %v347 = vsel %vm289, %v344, 0.0
        %348 = vrot.lane.b32.xlu0 %v308, 127
        %v349 = vpop.permute.xlu0 %348
        %350 = vrot.lane.b32.xlu0 %v309, 127
        %v351 = vpop.permute.xlu0 %350
        %vm352 = vcmp.lt.s32.totalorder %v278, 127
        %v353 = vsel %vm352, %v349, %v351
        %v354 = vsel %vm352, %v351, %v349
        %v355 = vsel %vm290, %v353, 0.0
        %v356 = vsel %vm291, %v354, 0.0
        %357 = vrot.lane.b32.xlu0 %v308, 113
        %v358 = vpop.permute.xlu0 %357
        %359 = vrot.lane.b32.xlu0 %v309, 113
        %v360 = vpop.permute.xlu0 %359
        %vm361 = vcmp.lt.s32.totalorder %v278, 113
        %v362 = vsel %vm361, %v358, %v360
        %v363 = vsel %vm361, %v360, %v358
        %v364 = vsel %vm296, %v362, 0.0
        %v365 = vsel %vm297, %v363, 0.0
        %366 = vrot.lane.b32.xlu0 %v308, 112
        %v367 = vpop.permute.xlu0 %366
        %368 = vrot.lane.b32.xlu0 %v309, 112
        %v369 = vpop.permute.xlu0 %368
        %vm370 = vcmp.lt.s32.totalorder %v278, 112
        %v371 = vsel %vm370, %v367, %v369
        %v372 = vsel %vm370, %v369, %v367
        %v373 = vsel %vm286, %v371, 0.0
        %v374 = vsel %vm287, %v372, 0.0
        %375 = vrot.lane.b32.xlu0 %v308, 111
        %v376 = vpop.permute.xlu0 %375
        %377 = vrot.lane.b32.xlu0 %v309, 111
        %v378 = vpop.permute.xlu0 %377
        %vm379 = vcmp.lt.s32.totalorder %v278, 111
        %v380 = vsel %vm379, %v376, %v378
        %v381 = vsel %vm379, %v378, %v376
        %v382 = vsel %vm298, %v380, 0.0
        %v383 = vsel %vm299, %v381, 0.0
        %s384 = sld [smem:[#allocation2]]
        %v385 = vstv %s384
        %v386 = vmul.f32 %v385, %v319
        %v387 = vmul.f32 %v385, %v320
        %s388 = sld [smem:[#allocation2 + $0x1]]
        %v389 = vstv %s388
        %v390 = vmul.f32 %v389, %v328
        %v391 = vmul.f32 %v389, %v329
        %v392 = vadd.f32 %v386, %v390
        %v393 = vadd.f32 %v387, %v391
        %s394 = sld [smem:[#allocation2 + $0x2]]
        %v395 = vstv %s394
        %v396 = vmul.f32 %v395, %v337
        %v397 = vmul.f32 %v395, %v338
        %v398 = vadd.f32 %v392, %v396
        %v399 = vadd.f32 %v393, %v397
        %s400 = sld [smem:[#allocation2 + $0x3]]
        %v401 = vstv %s400
        %v402 = vmul.f32 %v401, %v346
        %v403 = vmul.f32 %v401, %v347
        %v404 = vadd.f32 %v398, %v402
        %v405 = vadd.f32 %v399, %v403
        %s406 = sld [smem:[#allocation2 + $0x4]]
        %v407 = vstv %s406
        %v408 = vmul.f32 %v407, %v306
        %v410 = vperm.slane %v408, 0
        %v411 = vperm.slane %v408, 1
        %v414 = vadd.f32 %v404, %v410
        %v415 = vadd.f32 %v405, %v411
        %s416 = sld [smem:[#allocation2 + $0x5]]
        %v417 = vstv %s416
        %v418 = vmul.f32 %v417, %v355
        %v419 = vmul.f32 %v417, %v356
        %v420 = vadd.f32 %v414, %v418
        %v421 = vadd.f32 %v415, %v419
        %s422 = sld [smem:[#allocation2 + $0x6]]
        %v423 = vstv %s422
        %v424 = vmul.f32 %v423, %v364
        %v425 = vmul.f32 %v423, %v365
        %v426 = vadd.f32 %v420, %v424
        %v427 = vadd.f32 %v421, %v425
        %s428 = sld [smem:[#allocation2 + $0x7]]
        %v429 = vstv %s428
        %v430 = vmul.f32 %v429, %v373
        %v431 = vmul.f32 %v429, %v374
        %v432 = vadd.f32 %v426, %v430
        %v433 = vadd.f32 %v427, %v431
        %s434 = sld [smem:[#allocation2 + $0x8]]
        %v435 = vstv %s434
        %v436 = vmul.f32 %v435, %v382
        %v437 = vmul.f32 %v435, %v383
        %v438 = vadd.f32 %v432, %v436
        %v439 = vadd.f32 %v433, %v437
        %v440 = vadd.f32 %v301, %v438
        %v441 = vadd.f32 %v301, %v439
        %s442 = sld [smem:[#allocation2 + $0x1b]]
        %v443 = vstv %s442
        %v444 = vmul.f32 %v443, %v319
        %v445 = vmul.f32 %v443, %v320
        %s446 = sld [smem:[#allocation2 + $0x1c]]
        %v447 = vstv %s446
        %v448 = vmul.f32 %v447, %v328
        %v449 = vmul.f32 %v447, %v329
        %v450 = vadd.f32 %v444, %v448
        %v451 = vadd.f32 %v445, %v449
        %s452 = sld [smem:[#allocation2 + $0x1d]]
        %v453 = vstv %s452
        %v454 = vmul.f32 %v453, %v337
        %v455 = vmul.f32 %v453, %v338
        %v456 = vadd.f32 %v450, %v454
        %v457 = vadd.f32 %v451, %v455
        %s458 = sld [smem:[#allocation2 + $0x1e]]
        %v459 = vstv %s458
        %v460 = vmul.f32 %v459, %v346
        %v461 = vmul.f32 %v459, %v347
        %v462 = vadd.f32 %v456, %v460
        %v463 = vadd.f32 %v457, %v461
        %s464 = sld [smem:[#allocation2 + $0x1f]]
        %v465 = vstv %s464
        %v466 = vmul.f32 %v465, %v306
        %v468 = vperm.slane %v466, 0
        %v469 = vperm.slane %v466, 1
        %v472 = vadd.f32 %v462, %v468
        %v473 = vadd.f32 %v463, %v469
        %s474 = sld [smem:[#allocation2 + $0x20]]
        %v475 = vstv %s474
        %v476 = vmul.f32 %v475, %v355
        %v477 = vmul.f32 %v475, %v356
        %v478 = vadd.f32 %v472, %v476
        %v479 = vadd.f32 %v473, %v477
        %s480 = sld [smem:[#allocation2 + $0x21]]
        %v481 = vstv %s480
        %v482 = vmul.f32 %v481, %v364
        %v483 = vmul.f32 %v481, %v365
        %v484 = vadd.f32 %v478, %v482
        %v485 = vadd.f32 %v479, %v483
        %s486 = sld [smem:[#allocation2 + $0x22]]
        %v487 = vstv %s486
        %v488 = vmul.f32 %v487, %v373
        %v489 = vmul.f32 %v487, %v374
        %v490 = vadd.f32 %v484, %v488
        %v491 = vadd.f32 %v485, %v489
        %s492 = sld [smem:[#allocation2 + $0x23]]
        %v493 = vstv %s492
        %v494 = vmul.f32 %v493, %v382
        %v495 = vmul.f32 %v493, %v383
        %v496 = vadd.f32 %v490, %v494
        %v497 = vadd.f32 %v491, %v495
        %v498 = vadd.f32 %v303, %v496
        %v499 = vadd.f32 %v303, %v497
        %s500 = sld [smem:[#allocation2 + $0x36]]
        %v501 = vstv %s500
        %v502 = vmul.f32 %v501, %v319
        %v503 = vmul.f32 %v501, %v320
        %s504 = sld [smem:[#allocation2 + $0x37]]
        %v505 = vstv %s504
        %v506 = vmul.f32 %v505, %v328
        %v507 = vmul.f32 %v505, %v329
        %v508 = vadd.f32 %v502, %v506
        %v509 = vadd.f32 %v503, %v507
        %s510 = sld [smem:[#allocation2 + $0x38]]
        %v511 = vstv %s510
        %v512 = vmul.f32 %v511, %v337
        %v513 = vmul.f32 %v511, %v338
        %v514 = vadd.f32 %v508, %v512
        %v515 = vadd.f32 %v509, %v513
        %s516 = sld [smem:[#allocation2 + $0x39]]
        %v517 = vstv %s516
        %v518 = vmul.f32 %v517, %v346
        %v519 = vmul.f32 %v517, %v347
        %v520 = vadd.f32 %v514, %v518
        %v521 = vadd.f32 %v515, %v519
        %s522 = sld [smem:[#allocation2 + $0x3a]]
        %v523 = vstv %s522
        %v524 = vmul.f32 %v523, %v306
        %v526 = vperm.slane %v524, 0
        %v527 = vperm.slane %v524, 1
        %v530 = vadd.f32 %v520, %v526
        %v531 = vadd.f32 %v521, %v527
        %s532 = sld [smem:[#allocation2 + $0x3b]]
        %v533 = vstv %s532
        %v534 = vmul.f32 %v533, %v355
        %v535 = vmul.f32 %v533, %v356
        %v536 = vadd.f32 %v530, %v534
        %v537 = vadd.f32 %v531, %v535
        %s538 = sld [smem:[#allocation2 + $0x3c]]
        %v539 = vstv %s538
        %v540 = vmul.f32 %v539, %v364
        %v541 = vmul.f32 %v539, %v365
        %v542 = vadd.f32 %v536, %v540
        %v543 = vadd.f32 %v537, %v541
        %s544 = sld [smem:[#allocation2 + $0x3d]]
        %v545 = vstv %s544
        %v546 = vmul.f32 %v545, %v373
        %v547 = vmul.f32 %v545, %v374
        %v548 = vadd.f32 %v542, %v546
        %v549 = vadd.f32 %v543, %v547
        %s550 = sld [smem:[#allocation2 + $0x3e]]
        %v551 = vstv %s550
        %v552 = vmul.f32 %v551, %v382
        %v553 = vmul.f32 %v551, %v383
        %v554 = vadd.f32 %v548, %v552
        %v555 = vadd.f32 %v549, %v553
        %v556 = vadd.f32 %v305, %v554
        %v557 = vadd.f32 %v305, %v555
        %s558 = scalar_lea.vmem %s271, 1
        %v559 = vld [vmem:[%s558] ss:$4 sm:$0x3]
        %v561 = vperm.slane %v559, 0
        %v562 = vperm.slane %v559, 1
        %565 = vrot.lane.b32.xlu0 %v561, 17
        %v566 = vpop.permute.xlu0 %565
        %567 = vrot.lane.b32.xlu0 %v562, 17
        %v568 = vpop.permute.xlu0 %567
        %v569 = vsel %vm316, %v566, %v568
        %v570 = vsel %vm316, %v568, %v566
        %v571 = vsel %vm292, %v570, 0.0
        %v572 = vsel %vm293, %v569, 0.0
        %573 = vrot.lane.b32.xlu0 %v561, 16
        %v574 = vpop.permute.xlu0 %573
        %575 = vrot.lane.b32.xlu0 %v562, 16
        %v576 = vpop.permute.xlu0 %575
        %v577 = vsel %vm325, %v574, %v576
        %v578 = vsel %vm325, %v576, %v574
        %v579 = vsel %vm284, %v578, 0.0
        %v580 = vsel %vm285, %v577, 0.0
        %581 = vrot.lane.b32.xlu0 %v561, 15
        %v582 = vpop.permute.xlu0 %581
        %583 = vrot.lane.b32.xlu0 %v562, 15
        %v584 = vpop.permute.xlu0 %583
        %v585 = vsel %vm334, %v582, %v584
        %v586 = vsel %vm334, %v584, %v582
        %v587 = vsel %vm294, %v586, 0.0
        %v588 = vsel %vm295, %v585, 0.0
        %589 = vrot.lane.b32.xlu0 %v561, 1
        %v590 = vpop.permute.xlu0 %589
        %591 = vrot.lane.b32.xlu0 %v562, 1
        %v592 = vpop.permute.xlu0 %591
        %v593 = vsel %vm343, %v590, %v592
        %v594 = vsel %vm343, %v592, %v590
        %v595 = vsel %vm288, %v594, 0.0
        %v596 = vsel %vm289, %v593, 0.0
        %597 = vrot.lane.b32.xlu0 %v561, 127
        %v598 = vpop.permute.xlu0 %597
        %599 = vrot.lane.b32.xlu0 %v562, 127
        %v600 = vpop.permute.xlu0 %599
        %v601 = vsel %vm352, %v598, %v600
        %v602 = vsel %vm352, %v600, %v598
        %v603 = vsel %vm290, %v601, 0.0
        %v604 = vsel %vm291, %v602, 0.0
        %605 = vrot.lane.b32.xlu0 %v561, 113
        %v606 = vpop.permute.xlu0 %605
        %607 = vrot.lane.b32.xlu0 %v562, 113
        %v608 = vpop.permute.xlu0 %607
        %v609 = vsel %vm361, %v606, %v608
        %v610 = vsel %vm361, %v608, %v606
        %v611 = vsel %vm296, %v609, 0.0
        %v612 = vsel %vm297, %v610, 0.0
        %613 = vrot.lane.b32.xlu0 %v561, 112
        %v614 = vpop.permute.xlu0 %613
        %615 = vrot.lane.b32.xlu0 %v562, 112
        %v616 = vpop.permute.xlu0 %615
        %v617 = vsel %vm370, %v614, %v616
        %v618 = vsel %vm370, %v616, %v614
        %v619 = vsel %vm286, %v617, 0.0
        %v620 = vsel %vm287, %v618, 0.0
        %621 = vrot.lane.b32.xlu0 %v561, 111
        %v622 = vpop.permute.xlu0 %621
        %623 = vrot.lane.b32.xlu0 %v562, 111
        %v624 = vpop.permute.xlu0 %623
        %v625 = vsel %vm379, %v622, %v624
        %v626 = vsel %vm379, %v624, %v622
        %v627 = vsel %vm298, %v625, 0.0
        %v628 = vsel %vm299, %v626, 0.0
        %s629 = sld [smem:[#allocation2 + $0x9]]
        %v630 = vstv %s629
        %v631 = vmul.f32 %v630, %v571
        %v632 = vmul.f32 %v630, %v572
        %s633 = sld [smem:[#allocation2 + $0xa]]
        %v634 = vstv %s633
        %v635 = vmul.f32 %v634, %v579
        %v636 = vmul.f32 %v634, %v580
        %v637 = vadd.f32 %v631, %v635
        %v638 = vadd.f32 %v632, %v636
        %s639 = sld [smem:[#allocation2 + $0xb]]
        %v640 = vstv %s639
        %v641 = vmul.f32 %v640, %v587
        %v642 = vmul.f32 %v640, %v588
        %v643 = vadd.f32 %v637, %v641
        %v644 = vadd.f32 %v638, %v642
        %s645 = sld [smem:[#allocation2 + $0xc]]
        %v646 = vstv %s645
        %v647 = vmul.f32 %v646, %v595
        %v648 = vmul.f32 %v646, %v596
        %v649 = vadd.f32 %v643, %v647
        %v650 = vadd.f32 %v644, %v648
        %s651 = sld [smem:[#allocation2 + $0xd]]
        %v652 = vstv %s651
        %v653 = vmul.f32 %v652, %v559
        %v655 = vperm.slane %v653, 0
        %v656 = vperm.slane %v653, 1
        %v659 = vadd.f32 %v649, %v655
        %v660 = vadd.f32 %v650, %v656
        %s661 = sld [smem:[#allocation2 + $0xe]]
        %v662 = vstv %s661
        %v663 = vmul.f32 %v662, %v603
        %v664 = vmul.f32 %v662, %v604
        %v665 = vadd.f32 %v659, %v663
        %v666 = vadd.f32 %v660, %v664
        %s667 = sld [smem:[#allocation2 + $0xf]]
        %v668 = vstv %s667
        %v669 = vmul.f32 %v668, %v611
        %v670 = vmul.f32 %v668, %v612
        %v671 = vadd.f32 %v665, %v669
        %v672 = vadd.f32 %v666, %v670
        %s673 = sld [smem:[#allocation2 + $0x10]]
        %v674 = vstv %s673
        %v675 = vmul.f32 %v674, %v619
        %v676 = vmul.f32 %v674, %v620
        %v677 = vadd.f32 %v671, %v675
        %v678 = vadd.f32 %v672, %v676
        %s679 = sld [smem:[#allocation2 + $0x11]]
        %v680 = vstv %s679
        %v681 = vmul.f32 %v680, %v627
        %v682 = vmul.f32 %v680, %v628
        %v683 = vadd.f32 %v677, %v681
        %v684 = vadd.f32 %v678, %v682
        %v685 = vadd.f32 %v440, %v683
        %v686 = vadd.f32 %v441, %v684
        %s687 = sld [smem:[#allocation2 + $0x24]]
        %v688 = vstv %s687
        %v689 = vmul.f32 %v688, %v571
        %v690 = vmul.f32 %v688, %v572
        %s691 = sld [smem:[#allocation2 + $0x25]]
        %v692 = vstv %s691
        %v693 = vmul.f32 %v692, %v579
        %v694 = vmul.f32 %v692, %v580
        %v695 = vadd.f32 %v689, %v693
        %v696 = vadd.f32 %v690, %v694
        %s697 = sld [smem:[#allocation2 + $0x26]]
        %v698 = vstv %s697
        %v699 = vmul.f32 %v698, %v587
        %v700 = vmul.f32 %v698, %v588
        %v701 = vadd.f32 %v695, %v699
        %v702 = vadd.f32 %v696, %v700
        %s703 = sld [smem:[#allocation2 + $0x27]]
        %v704 = vstv %s703
        %v705 = vmul.f32 %v704, %v595
        %v706 = vmul.f32 %v704, %v596
        %v707 = vadd.f32 %v701, %v705
        %v708 = vadd.f32 %v702, %v706
        %s709 = sld [smem:[#allocation2 + $0x28]]
        %v710 = vstv %s709
        %v711 = vmul.f32 %v710, %v559
        %v713 = vperm.slane %v711, 0
        %v714 = vperm.slane %v711, 1
        %v717 = vadd.f32 %v707, %v713
        %v718 = vadd.f32 %v708, %v714
        %s719 = sld [smem:[#allocation2 + $0x29]]
        %v720 = vstv %s719
        %v721 = vmul.f32 %v720, %v603
        %v722 = vmul.f32 %v720, %v604
        %v723 = vadd.f32 %v717, %v721
        %v724 = vadd.f32 %v718, %v722
        %s725 = sld [smem:[#allocation2 + $0x2a]]
        %v726 = vstv %s725
        %v727 = vmul.f32 %v726, %v611
        %v728 = vmul.f32 %v726, %v612
        %v729 = vadd.f32 %v723, %v727
        %v730 = vadd.f32 %v724, %v728
        %s731 = sld [smem:[#allocation2 + $0x2b]]
        %v732 = vstv %s731
        %v733 = vmul.f32 %v732, %v619
        %v734 = vmul.f32 %v732, %v620
        %v735 = vadd.f32 %v729, %v733
        %v736 = vadd.f32 %v730, %v734
        %s737 = sld [smem:[#allocation2 + $0x2c]]
        %v738 = vstv %s737
        %v739 = vmul.f32 %v738, %v627
        %v740 = vmul.f32 %v738, %v628
        %v741 = vadd.f32 %v735, %v739
        %v742 = vadd.f32 %v736, %v740
        %v743 = vadd.f32 %v498, %v741
        %v744 = vadd.f32 %v499, %v742
        %s745 = sld [smem:[#allocation2 + $0x3f]]
        %v746 = vstv %s745
        %v747 = vmul.f32 %v746, %v571
        %v748 = vmul.f32 %v746, %v572
        %s749 = sld [smem:[#allocation2 + $0x40]]
        %v750 = vstv %s749
        %v751 = vmul.f32 %v750, %v579
        %v752 = vmul.f32 %v750, %v580
        %v753 = vadd.f32 %v747, %v751
        %v754 = vadd.f32 %v748, %v752
        %s755 = sld [smem:[#allocation2 + $0x41]]
        %v756 = vstv %s755
        %v757 = vmul.f32 %v756, %v587
        %v758 = vmul.f32 %v756, %v588
        %v759 = vadd.f32 %v753, %v757
        %v760 = vadd.f32 %v754, %v758
        %s761 = sld [smem:[#allocation2 + $0x42]]
        %v762 = vstv %s761
        %v763 = vmul.f32 %v762, %v595
        %v764 = vmul.f32 %v762, %v596
        %v765 = vadd.f32 %v759, %v763
        %v766 = vadd.f32 %v760, %v764
        %s767 = sld [smem:[#allocation2 + $0x43]]
        %v768 = vstv %s767
        %v769 = vmul.f32 %v768, %v559
        %v771 = vperm.slane %v769, 0
        %v772 = vperm.slane %v769, 1
        %v775 = vadd.f32 %v765, %v771
        %v776 = vadd.f32 %v766, %v772
        %s777 = sld [smem:[#allocation2 + $0x44]]
        %v778 = vstv %s777
        %v779 = vmul.f32 %v778, %v603
        %v780 = vmul.f32 %v778, %v604
        %v781 = vadd.f32 %v775, %v779
        %v782 = vadd.f32 %v776, %v780
        %s783 = sld [smem:[#allocation2 + $0x45]]
        %v784 = vstv %s783
        %v785 = vmul.f32 %v784, %v611
        %v786 = vmul.f32 %v784, %v612
        %v787 = vadd.f32 %v781, %v785
        %v788 = vadd.f32 %v782, %v786
        %s789 = sld [smem:[#allocation2 + $0x46]]
        %v790 = vstv %s789
        %v791 = vmul.f32 %v790, %v619
        %v792 = vmul.f32 %v790, %v620
        %v793 = vadd.f32 %v787, %v791
        %v794 = vadd.f32 %v788, %v792
        %s795 = sld [smem:[#allocation2 + $0x47]]
        %v796 = vstv %s795
        %v797 = vmul.f32 %v796, %v627
        %v798 = vmul.f32 %v796, %v628
        %v799 = vadd.f32 %v793, %v797
        %v800 = vadd.f32 %v794, %v798
        %v801 = vadd.f32 %v556, %v799
        %v802 = vadd.f32 %v557, %v800
        %s803 = scalar_lea.vmem %s271, 2
        %v804 = vld [vmem:[%s803] ss:$4 sm:$0x3]
        %v806 = vperm.slane %v804, 0
        %v807 = vperm.slane %v804, 1
        %810 = vrot.lane.b32.xlu0 %v806, 17
        %v811 = vpop.permute.xlu0 %810
        %812 = vrot.lane.b32.xlu0 %v807, 17
        %v813 = vpop.permute.xlu0 %812
        %v814 = vsel %vm316, %v811, %v813
        %v815 = vsel %vm316, %v813, %v811
        %v816 = vsel %vm292, %v815, 0.0
        %v817 = vsel %vm293, %v814, 0.0
        %818 = vrot.lane.b32.xlu0 %v806, 16
        %v819 = vpop.permute.xlu0 %818
        %820 = vrot.lane.b32.xlu0 %v807, 16
        %v821 = vpop.permute.xlu0 %820
        %v822 = vsel %vm325, %v819, %v821
        %v823 = vsel %vm325, %v821, %v819
        %v824 = vsel %vm284, %v823, 0.0
        %v825 = vsel %vm285, %v822, 0.0
        %826 = vrot.lane.b32.xlu0 %v806, 15
        %v827 = vpop.permute.xlu0 %826
        %828 = vrot.lane.b32.xlu0 %v807, 15
        %v829 = vpop.permute.xlu0 %828
        %v830 = vsel %vm334, %v827, %v829
        %v831 = vsel %vm334, %v829, %v827
        %v832 = vsel %vm294, %v831, 0.0
        %v833 = vsel %vm295, %v830, 0.0
        %834 = vrot.lane.b32.xlu0 %v806, 1
        %v835 = vpop.permute.xlu0 %834
        %836 = vrot.lane.b32.xlu0 %v807, 1
        %v837 = vpop.permute.xlu0 %836
        %v838 = vsel %vm343, %v835, %v837
        %v839 = vsel %vm343, %v837, %v835
        %v840 = vsel %vm288, %v839, 0.0
        %v841 = vsel %vm289, %v838, 0.0
        %842 = vrot.lane.b32.xlu0 %v806, 127
        %v843 = vpop.permute.xlu0 %842
        %844 = vrot.lane.b32.xlu0 %v807, 127
        %v845 = vpop.permute.xlu0 %844
        %v846 = vsel %vm352, %v843, %v845
        %v847 = vsel %vm352, %v845, %v843
        %v848 = vsel %vm290, %v846, 0.0
        %v849 = vsel %vm291, %v847, 0.0
        %850 = vrot.lane.b32.xlu0 %v806, 113
        %v851 = vpop.permute.xlu0 %850
        %852 = vrot.lane.b32.xlu0 %v807, 113
        %v853 = vpop.permute.xlu0 %852
        %v854 = vsel %vm361, %v851, %v853
        %v855 = vsel %vm361, %v853, %v851
        %v856 = vsel %vm296, %v854, 0.0
        %v857 = vsel %vm297, %v855, 0.0
        %858 = vrot.lane.b32.xlu0 %v806, 112
        %v859 = vpop.permute.xlu0 %858
        %860 = vrot.lane.b32.xlu0 %v807, 112
        %v861 = vpop.permute.xlu0 %860
        %v862 = vsel %vm370, %v859, %v861
        %v863 = vsel %vm370, %v861, %v859
        %v864 = vsel %vm286, %v862, 0.0
        %v865 = vsel %vm287, %v863, 0.0
        %866 = vrot.lane.b32.xlu0 %v806, 111
        %v867 = vpop.permute.xlu0 %866
        %868 = vrot.lane.b32.xlu0 %v807, 111
        %v869 = vpop.permute.xlu0 %868
        %v870 = vsel %vm379, %v867, %v869
        %v871 = vsel %vm379, %v869, %v867
        %v872 = vsel %vm298, %v870, 0.0
        %v873 = vsel %vm299, %v871, 0.0
        %s874 = sld [smem:[#allocation2 + $0x12]]
        %v875 = vstv %s874
        %v876 = vmul.f32 %v875, %v816
        %v877 = vmul.f32 %v875, %v817
        %s878 = sld [smem:[#allocation2 + $0x13]]
        %v879 = vstv %s878
        %v880 = vmul.f32 %v879, %v824
        %v881 = vmul.f32 %v879, %v825
        %v882 = vadd.f32 %v876, %v880
        %v883 = vadd.f32 %v877, %v881
        %s884 = sld [smem:[#allocation2 + $0x14]]
        %v885 = vstv %s884
        %v886 = vmul.f32 %v885, %v832
        %v887 = vmul.f32 %v885, %v833
        %v888 = vadd.f32 %v882, %v886
        %v889 = vadd.f32 %v883, %v887
        %s890 = sld [smem:[#allocation2 + $0x15]]
        %v891 = vstv %s890
        %v892 = vmul.f32 %v891, %v840
        %v893 = vmul.f32 %v891, %v841
        %v894 = vadd.f32 %v888, %v892
        %v895 = vadd.f32 %v889, %v893
        %s896 = sld [smem:[#allocation2 + $0x16]]
        %v897 = vstv %s896
        %v898 = vmul.f32 %v897, %v804
        %v900 = vperm.slane %v898, 0
        %v901 = vperm.slane %v898, 1
        %v904 = vadd.f32 %v894, %v900
        %v905 = vadd.f32 %v895, %v901
        %s906 = sld [smem:[#allocation2 + $0x17]]
        %v907 = vstv %s906
        %v908 = vmul.f32 %v907, %v848
        %v909 = vmul.f32 %v907, %v849
        %v910 = vadd.f32 %v904, %v908
        %v911 = vadd.f32 %v905, %v909
        %s912 = sld [smem:[#allocation2 + $0x18]]
        %v913 = vstv %s912
        %v914 = vmul.f32 %v913, %v856
        %v915 = vmul.f32 %v913, %v857
        %v916 = vadd.f32 %v910, %v914
        %v917 = vadd.f32 %v911, %v915
        %s918 = sld [smem:[#allocation2 + $0x19]]
        %v919 = vstv %s918
        %v920 = vmul.f32 %v919, %v864
        %v921 = vmul.f32 %v919, %v865
        %v922 = vadd.f32 %v916, %v920
        %v923 = vadd.f32 %v917, %v921
        %s924 = sld [smem:[#allocation2 + $0x1a]]
        %v925 = vstv %s924
        %v926 = vmul.f32 %v925, %v872
        %v927 = vmul.f32 %v925, %v873
        %v928 = vadd.f32 %v922, %v926
        %v929 = vadd.f32 %v923, %v927
        %v930 = vadd.f32 %v685, %v928
        %v931 = vadd.f32 %v686, %v929
        %s932 = sld [smem:[#allocation2 + $0x2d]]
        %v933 = vstv %s932
        %v934 = vmul.f32 %v933, %v816
        %v935 = vmul.f32 %v933, %v817
        %s936 = sld [smem:[#allocation2 + $0x2e]]
        %v937 = vstv %s936
        %v938 = vmul.f32 %v937, %v824
        %v939 = vmul.f32 %v937, %v825
        %v940 = vadd.f32 %v934, %v938
        %v941 = vadd.f32 %v935, %v939
        %s942 = sld [smem:[#allocation2 + $0x2f]]
        %v943 = vstv %s942
        %v944 = vmul.f32 %v943, %v832
        %v945 = vmul.f32 %v943, %v833
        %v946 = vadd.f32 %v940, %v944
        %v947 = vadd.f32 %v941, %v945
        %s948 = sld [smem:[#allocation2 + $0x30]]
        %v949 = vstv %s948
        %v950 = vmul.f32 %v949, %v840
        %v951 = vmul.f32 %v949, %v841
        %v952 = vadd.f32 %v946, %v950
        %v953 = vadd.f32 %v947, %v951
        %s954 = sld [smem:[#allocation2 + $0x31]]
        %v955 = vstv %s954
        %v956 = vmul.f32 %v955, %v804
        %v958 = vperm.slane %v956, 0
        %v959 = vperm.slane %v956, 1
        %v962 = vadd.f32 %v952, %v958
        %v963 = vadd.f32 %v953, %v959
        %s964 = sld [smem:[#allocation2 + $0x32]]
        %v965 = vstv %s964
        %v966 = vmul.f32 %v965, %v848
        %v967 = vmul.f32 %v965, %v849
        %v968 = vadd.f32 %v962, %v966
        %v969 = vadd.f32 %v963, %v967
        %s970 = sld [smem:[#allocation2 + $0x33]]
        %v971 = vstv %s970
        %v972 = vmul.f32 %v971, %v856
        %v973 = vmul.f32 %v971, %v857
        %v974 = vadd.f32 %v968, %v972
        %v975 = vadd.f32 %v969, %v973
        %s976 = sld [smem:[#allocation2 + $0x34]]
        %v977 = vstv %s976
        %v978 = vmul.f32 %v977, %v864
        %v979 = vmul.f32 %v977, %v865
        %v980 = vadd.f32 %v974, %v978
        %v981 = vadd.f32 %v975, %v979
        %s982 = sld [smem:[#allocation2 + $0x35]]
        %v983 = vstv %s982
        %v984 = vmul.f32 %v983, %v872
        %v985 = vmul.f32 %v983, %v873
        %v986 = vadd.f32 %v980, %v984
        %v987 = vadd.f32 %v981, %v985
        %v988 = vadd.f32 %v743, %v986
        %v989 = vadd.f32 %v744, %v987
        %s990 = sld [smem:[#allocation2 + $0x48]]
        %v991 = vstv %s990
        %v992 = vmul.f32 %v991, %v816
        %v993 = vmul.f32 %v991, %v817
        %s994 = sld [smem:[#allocation2 + $0x49]]
        %v995 = vstv %s994
        %v996 = vmul.f32 %v995, %v824
        %v997 = vmul.f32 %v995, %v825
        %v998 = vadd.f32 %v992, %v996
        %v999 = vadd.f32 %v993, %v997
        %s1000 = sld [smem:[#allocation2 + $0x4a]]
        %v1001 = vstv %s1000
        %v1002 = vmul.f32 %v1001, %v832
        %v1003 = vmul.f32 %v1001, %v833
        %v1004 = vadd.f32 %v998, %v1002
        %v1005 = vadd.f32 %v999, %v1003
        %s1006 = sld [smem:[#allocation2 + $0x4b]]
        %v1007 = vstv %s1006
        %v1008 = vmul.f32 %v1007, %v840
        %v1009 = vmul.f32 %v1007, %v841
        %v1010 = vadd.f32 %v1004, %v1008
        %v1011 = vadd.f32 %v1005, %v1009
        %s1012 = sld [smem:[#allocation2 + $0x4c]]
        %v1013 = vstv %s1012
        %v1014 = vmul.f32 %v1013, %v804
        %v1016 = vperm.slane %v1014, 0
        %v1017 = vperm.slane %v1014, 1
        %v1020 = vadd.f32 %v1010, %v1016
        %v1021 = vadd.f32 %v1011, %v1017
        %s1022 = sld [smem:[#allocation2 + $0x4d]]
        %v1023 = vstv %s1022
        %v1024 = vmul.f32 %v1023, %v848
        %v1025 = vmul.f32 %v1023, %v849
        %v1026 = vadd.f32 %v1020, %v1024
        %v1027 = vadd.f32 %v1021, %v1025
        %s1028 = sld [smem:[#allocation2 + $0x4e]]
        %v1029 = vstv %s1028
        %v1030 = vmul.f32 %v1029, %v856
        %v1031 = vmul.f32 %v1029, %v857
        %v1032 = vadd.f32 %v1026, %v1030
        %v1033 = vadd.f32 %v1027, %v1031
        %s1034 = sld [smem:[#allocation2 + $0x4f]]
        %v1035 = vstv %s1034
        %v1036 = vmul.f32 %v1035, %v864
        %v1037 = vmul.f32 %v1035, %v865
        %v1038 = vadd.f32 %v1032, %v1036
        %v1039 = vadd.f32 %v1033, %v1037
        %s1040 = sld [smem:[#allocation2 + $0x50]]
        %v1041 = vstv %s1040
        %v1042 = vmul.f32 %v1041, %v872
        %v1043 = vmul.f32 %v1041, %v873
        %v1044 = vadd.f32 %v1038, %v1042
        %v1045 = vadd.f32 %v1039, %v1043
        %v1046 = vadd.f32 %v801, %v1044
        %v1047 = vadd.f32 %v802, %v1045
        %v1048 = vadd.f32 %v930, %v988
        %v1049 = vadd.f32 %v931, %v989
        %v1050 = vadd.f32 %v1048, %v1046
        %v1051 = vadd.f32 %v1049, %v1047
        %v1052 = vmul.f32 %v1050, 0.33333334
        %v1053 = vmul.f32 %v1051, 0.33333334
        %v1054 = vsub.f32 %v930, %v1052
        %v1055 = vsub.f32 %v931, %v1053
        %v1056 = vsub.f32 %v988, %v1052
        %v1057 = vsub.f32 %v989, %v1053
        %v1058 = vsub.f32 %v1046, %v1052
        %v1059 = vsub.f32 %v1047, %v1053
        %v1060 = vmul.f32 %v1054, %v1054
        %v1061 = vmul.f32 %v1055, %v1055
        %v1062 = vmul.f32 %v1056, %v1056
        %v1063 = vmul.f32 %v1057, %v1057
        %v1064 = vadd.f32 %v1060, %v1062
        %v1065 = vadd.f32 %v1061, %v1063
        %v1066 = vmul.f32 %v1058, %v1058
        %v1067 = vmul.f32 %v1059, %v1059
        %v1068 = vadd.f32 %v1064, %v1066
        %v1069 = vadd.f32 %v1065, %v1067
        %v1070 = vmul.f32 %v1068, 0.33333334
        %v1071 = vmul.f32 %v1069, 0.33333334
        %v1072 = vadd.f32 %v1070, 1e-05
        %v1073 = vadd.f32 %v1071, 1e-05
        %v1074 = vrsqrt.pop %v1072
        %v1075 = vmul.f32 %v1074, %v1072
        %v1076 = vmul.f32 %v1075, %v1074
        %v1077 = vmul.f32 0.5, %v1076
        %v1078 = vsub.f32 1.5, %v1077
        %v1079 = vmul.f32 %v1074, %v1078
        %vm1080 = vweird.f32 %v1072
        %vm1081 = vweird.f32 %v1074
        %vm1082 = vmor %vm1080, %vm1081
        %v1083 = vsel %vm1082, %v1074, %v1079
        %v1084 = vrsqrt.pop %v1073
        %v1085 = vmul.f32 %v1084, %v1073
        %v1086 = vmul.f32 %v1085, %v1084
        %v1087 = vmul.f32 0.5, %v1086
        %v1088 = vsub.f32 1.5, %v1087
        %v1089 = vmul.f32 %v1084, %v1088
        %vm1090 = vweird.f32 %v1073
        %vm1091 = vweird.f32 %v1084
        %vm1092 = vmor %vm1090, %vm1091
        %v1093 = vsel %vm1092, %v1084, %v1089
        %s1094 = sld [smem:[#allocation6]]
        %v1095 = vstv %s1094
        %v1096 = vmul.f32 %v1083, %v1095
        %v1097 = vmul.f32 %v1093, %v1095
        %v1098 = vmul.f32 %v1054, %v1096
        %v1099 = vmul.f32 %v1055, %v1097
        %s1100 = sld [smem:[#allocation7]]
        %v1101 = vstv %s1100
        %v1102 = vadd.f32 %v1098, %v1101
        %v1103 = vadd.f32 %v1099, %v1101
        %v1104 = vmax.f32 %v1102, 0.0
        %v1105 = vmax.f32 %v1103, 0.0
        %v1108 = vrot.slane %v1105, 7
        %vm1109 = vcmask 1040384
        %v1110 = vsel %vm1109, %v1104, %v1108
        %v1112 = vlaneseq
        %vm1113 = vcmp.ge.s32.totalorder %v1112, 0
        %vm1114 = vcmp.lt.s32.totalorder %v1112, 256
        %vm1115 = vmand %vm1113, %vm1114
        %1116 = vst.msk [vmem:[%s276] ss:$4 sm:$0x3] %vm1115, %v1110
        %s1117 = sld [smem:[#allocation6 + $0x1]]
        %v1118 = vstv %s1117
        %v1119 = vmul.f32 %v1083, %v1118
        %v1120 = vmul.f32 %v1093, %v1118
        %v1121 = vmul.f32 %v1056, %v1119
        %v1122 = vmul.f32 %v1057, %v1120
        %s1123 = sld [smem:[#allocation7 + $0x1]]
        %v1124 = vstv %s1123
        %v1125 = vadd.f32 %v1121, %v1124
        %v1126 = vadd.f32 %v1122, %v1124
        %v1127 = vmax.f32 %v1125, 0.0
        %v1128 = vmax.f32 %v1126, 0.0
        %v1131 = vrot.slane %v1128, 7
        %v1132 = vsel %vm1109, %v1127, %v1131
        %s1134 = scalar_lea.vmem %s276, 1
        %1135 = vst.msk [vmem:[%s1134] ss:$4 sm:$0x3] %vm1115, %v1132
        %s1136 = sld [smem:[#allocation6 + $0x2]]
        %v1137 = vstv %s1136
        %v1138 = vmul.f32 %v1083, %v1137
        %v1139 = vmul.f32 %v1093, %v1137
        %v1140 = vmul.f32 %v1058, %v1138
        %v1141 = vmul.f32 %v1059, %v1139
        %s1142 = sld [smem:[#allocation7 + $0x2]]
        %v1143 = vstv %s1142
        %v1144 = vadd.f32 %v1140, %v1143
        %v1145 = vadd.f32 %v1141, %v1143
        %v1146 = vmax.f32 %v1144, 0.0
        %v1147 = vmax.f32 %v1145, 0.0
        %v1150 = vrot.slane %v1147, 7
        %v1151 = vsel %vm1109, %v1146, %v1150
        %s1153 = scalar_lea.vmem %s276, 2
        %1154 = vst.msk [vmem:[%s1153] ss:$4 sm:$0x3] %vm1115, %v1151
        %p1155 = scmp.lt.s32.totalorder %s19, 1
        %s1156 = scalar_select %p1155, %s19, 1
        %s1157 = smul.addr %s1156, 2
        %s1158 = smul.addr %s1157, 4
        %s1159 = scalar_lea.vmem %s5, %s1158
        // Predicated region
        $region57: #{tpu_custom_call.1} parent=39 // pred_check
          %p1160 = pneg %p147
        $region58: #{tpu_custom_call.1} parent=39 // pred_check_branch
          %1162 = sbr.rel (%p1160) target = $region60
        $region59: #{tpu_custom_call.1} parent=39 // pred_region
          _
        $region60: #{tpu_custom_call.1} parent=39 // pred_fallthru
          _
      $region40: #{tpu_custom_call.1} parent=5 // pred_fallthru
        _
      %p1163 = scmp.le.s32.totalorder 2, %s14
      // Predicated region
      $region61: #{tpu_custom_call.1} parent=5 // pred_check
        %p1164 = pneg %p1163
      $region62: #{tpu_custom_call.1} parent=5 // pred_check_branch
        %1166 = sbr.rel (%p1164) target = $region64
      $region63: #{tpu_custom_call.1} parent=5 // pred_region
        %s1167 = ssub.s32 %s14, 2
        // Predicated region
        $region65: #{tpu_custom_call.1} parent=63 // pred_check
          %p1168 = pneg %p153
        $region66: #{tpu_custom_call.1} parent=63 // pred_check_branch
          %1170 = sbr.rel (%p1168) target = $region68
        $region67: #{tpu_custom_call.1} parent=63 // pred_region
          %p1171 = scmp.lt.s32.totalorder %s20, 1
          %s1172 = scalar_select %p1171, %s20, 1
          %s1173 = smul.addr %s1172, 2
          %s1174 = smul.addr %s1173, 4
          %s1175 = scalar_lea.vmem %s5, %s1174
        $region68: #{tpu_custom_call.1} parent=63 // pred_fallthru
          _
      $region64: #{tpu_custom_call.1} parent=5 // pred_fallthru
        _
    $region6: #{tpu_custom_call.1} parent=1 // loop_footer
      %s18 = sadd.s32 1, %s14
    $region7: #{tpu_custom_call.1} parent=1 // loop_footer_branch
      %13 = sbr.rel target = $region3
    $region8: #{tpu_custom_call.1} parent=1 // loop_exit
      _
    %1176 = vsyncpa [#allocation3], 1
    %s1177 = scalar_lea.sflag [#allocation3], 1
    %1178 = vsyncpa %s1177, 1
    %1179 = vsyncpa [#allocation5], 1
    %1180 = vsyncpa [#allocation8], 1

</llo_original>
